<compile_context>
chip_gen: v5e
topology: v5e:2x2
jax: 0.10.0
libtpu: 0.0.40
codegen_flags: <defaults>
</compile_context>

<pallas_src>
import functools
import math

import jax
import jax.numpy as jnp
from jax.experimental import pallas as pl
from jax.experimental.pallas import tpu as pltpu


_HAS_BUFFERED = hasattr(pl, "Buffered")


def _round_up(x, m):
    return (x + m - 1) // m * m


def _spec(shape, index_map, buffers=None):
    """BlockSpec with an optional explicit pipeline buffer count."""
    if buffers is not None and _HAS_BUFFERED:
        return pl.BlockSpec(shape, index_map, pipeline_mode=pl.Buffered(buffers))
    return pl.BlockSpec(shape, index_map)


def _vmem_limit(entries):
    """entries: iterable of (shape, dtype, buffer_count).  Returns a VMEM byte
    hint with headroom, capped below v7x's 64 MiB physical VMEM."""
    total = 0
    for shape, dtype, nbuf in entries:
        dims = list(shape)
        if len(dims) >= 2:
            dims[-1] = _round_up(dims[-1], 128)
            dims[-2] = _round_up(dims[-2], 8)
        total += math.prod(dims) * jnp.dtype(dtype).itemsize * nbuf
    total = int(total * 1.5) + (4 << 20)          # scheduler / spill headroom
    return max(16 << 20, min(total, 56 << 20))


def encoder_kernel(h_ref, eps_ref,
                   w1_ref, b1_ref, w2_ref, b2_ref,
                   w3m_ref, b3m_ref, w3lv_ref, b3lv_ref,
                   d1_ref, db1_ref,
                   mean_ref, logvar_ref, kl_ref, latent_ref, y_ref,
                   *, true_b, true_l):
    # Encoder MLP (bf16 inputs, f32 MXU accumulation).
    h = h_ref[...]                                      # already bf16
    x = jnp.maximum(
        jnp.dot(h, w1_ref[...], preferred_element_type=jnp.float32)
        + b1_ref[...], 0.0)
    x = jnp.maximum(
        jnp.dot(x.astype(jnp.bfloat16), w2_ref[...],
                preferred_element_type=jnp.float32) + b2_ref[...], 0.0)
    xb = x.astype(jnp.bfloat16)

    # Lane-dense split heads: two dots instead of enc[:, :L] / enc[:, L:].
    mean = jnp.dot(xb, w3m_ref[...],
                   preferred_element_type=jnp.float32) + b3m_ref[...]
    log_var = jnp.dot(xb, w3lv_ref[...],
                      preferred_element_type=jnp.float32) + b3lv_ref[...]
    mean_ref[...] = mean
    logvar_ref[...] = log_var

    # KL: 0.5 * mean_L(exp(lv) + m^2 - 1 - lv), then batch mean (f32).
    # Padded lanes contribute exp(0)+0-1-0 == 0; padded rows are masked.
    term = jnp.exp(log_var) + mean * mean - 1.0 - log_var
    kl_row = 0.5 * jnp.sum(term, axis=1, keepdims=True) * (1.0 / true_l)
    row_id = jax.lax.broadcasted_iota(jnp.int32, kl_row.shape, 0)
    kl_row = jnp.where(row_id < true_b, kl_row, 0.0)
    kl_ref[0] = jnp.sum(kl_row) * (1.0 / true_b)

    # Reparameterize (f32).
    z = mean + eps_ref[...] * jnp.exp(0.5 * log_var)
    latent_ref[...] = z

    # Decoder layer 1; y goes to HBM (tiny: Bp*Hp bf16) so the d2-streaming
    # call can run with a fully parallel grid (megacore-shardable on v7x).
    y = jnp.maximum(
        jnp.dot(z.astype(jnp.bfloat16), d1_ref[...],
                preferred_element_type=jnp.float32) + db1_ref[...], 0.0)
    y_ref[...] = y.astype(jnp.bfloat16)


def decoder2_kernel(y_ref, d2_ref, db2_ref, emb_ref):
    # Decoder layer 2 for one streamed 512-wide output-feature tile of d2.
    emb_ref[...] = jax.nn.sigmoid(
        jnp.dot(y_ref[...], d2_ref[...], preferred_element_type=jnp.float32)
        + db2_ref[...]).astype(emb_ref.dtype)


def nesy_forward(last_hidden, eps, params, *, tn=512, use_buffered=True):
    """Fused Nesy VAE core on TPU via two pallas_calls.

    last_hidden: [B, H] f32   (stands in for llm.encode(...)[:, -1, :])
    eps:         [B, L] f32   gaussian noise for the reparameterization trick
    """
    B, H = last_hidden.shape
    L = eps.shape[1]
    E = params["d2"].shape[1]           # H * num_soft_token

    Bp = _round_up(B, 8)                # sublane grain
    Hp = _round_up(H, 128)              # lane / MXU grain
    Lp = _round_up(L, 128)
    tn = min(tn, _round_up(E, 128))     # don't over-pad tiny E
    Ep = _round_up(E, tn)
    n_tiles = Ep // tn

    f32, bf16 = jnp.float32, jnp.bfloat16

    def pad2(a, r, c, dt):
        out = jnp.zeros((r, c), dt)
        return out.at[:a.shape[0], :a.shape[1]].set(a.astype(dt))

    h_p = pad2(last_hidden, Bp, Hp, bf16)        # pre-cast h to bf16
    eps_p = pad2(eps, Bp, Lp, f32)
    w1 = pad2(params["w1"], Hp, Hp, bf16); b1 = pad2(params["b1"], 1, Hp, f32)
    w2 = pad2(params["w2"], Hp, Hp, bf16); b2 = pad2(params["b2"], 1, Hp, f32)
    w3, b3 = params["w3"], params["b3"]
    w3m = pad2(w3[:, :L], Hp, Lp, bf16);  b3m = pad2(b3[:, :L], 1, Lp, f32)
    w3lv = pad2(w3[:, L:], Hp, Lp, bf16); b3lv = pad2(b3[:, L:], 1, Lp, f32)
    d1 = pad2(params["d1"], Lp, Hp, bf16); db1 = pad2(params["db1"], 1, Hp, f32)
    d2 = pad2(params["d2"], Hp, Ep, bf16); db2 = pad2(params["db2"], 1, Ep, f32)

    buf1 = 1 if use_buffered else None           # single-buffer constants

    def const(shape):
        return _spec(shape, lambda i: (0, 0), buffers=buf1)

    # ---------- call 1: encoder MLP + KL + reparam + decoder layer 1 ----------
    # TODO(synk): once H grows so that w1/w2 (Hp*Hp bf16) no longer fit VMEM,
    # K-tile these matmuls with their own grid instead of full-residency.
    enc_grid = pltpu.PrefetchScalarGridSpec(
        num_scalar_prefetch=0,
        grid=(1,),
        in_specs=[
            const((Bp, Hp)),                          # h
            const((Bp, Lp)),                          # eps
            const((Hp, Hp)), const((1, Hp)),          # w1, b1
            const((Hp, Hp)), const((1, Hp)),          # w2, b2
            const((Hp, Lp)), const((1, Lp)),          # w3_mean, b3_mean
            const((Hp, Lp)), const((1, Lp)),          # w3_logvar, b3_logvar
            const((Lp, Hp)), const((1, Hp)),          # d1, db1
        ],
        out_specs=(
            pl.BlockSpec((Bp, Lp), lambda i: (0, 0)),             # mean
            pl.BlockSpec((Bp, Lp), lambda i: (0, 0)),             # log_var
            pl.BlockSpec(memory_space=pltpu.MemorySpace.SMEM),    # kl scalar
            pl.BlockSpec((Bp, Lp), lambda i: (0, 0)),             # latent
            pl.BlockSpec((Bp, Hp), lambda i: (0, 0)),             # y (bf16)
        ),
    )
    enc_out_shapes = (
        jax.ShapeDtypeStruct((Bp, Lp), f32),   # mean
        jax.ShapeDtypeStruct((Bp, Lp), f32),   # log_var
        jax.ShapeDtypeStruct((1,), f32),       # kl (SMEM scalar)
        jax.ShapeDtypeStruct((Bp, Lp), f32),   # latent
        jax.ShapeDtypeStruct((Bp, Hp), bf16),  # decoder layer-1 activations
    )
    enc_vmem = _vmem_limit([
        ((Bp, Hp), bf16, 2), ((Bp, Lp), f32, 2),
        ((Hp, Hp), bf16, 2), ((1, Hp), f32, 2),
        ((Hp, Hp), bf16, 2), ((1, Hp), f32, 2),
        ((Hp, Lp), bf16, 2), ((1, Lp), f32, 2),
        ((Hp, Lp), bf16, 2), ((1, Lp), f32, 2),
        ((Lp, Hp), bf16, 2), ((1, Hp), f32, 2),
        ((Bp, Lp), f32, 2), ((Bp, Lp), f32, 2),
        ((Bp, Lp), f32, 2), ((Bp, Hp), bf16, 2),
    ])

    mean, log_var, kl, latent, y = pl.pallas_call(
        functools.partial(encoder_kernel, true_b=B, true_l=L),
        out_shape=enc_out_shapes,
        grid_spec=enc_grid,
        compiler_params=pltpu.CompilerParams(
            dimension_semantics=("arbitrary",),
            vmem_limit_bytes=enc_vmem,
        ),
    )(h_p, eps_p, w1, b1, w2, b2, w3m, b3m, w3lv, b3lv, d1, db1)

    # ---------- call 2: decoder layer 2, streaming d2 output-feature tiles ----------
    # TODO(synk): for production, quantize d2 (int8 on v5e/v6e, fp8 on v7x) to
    # halve the HBM-bound weight stream; omitted here to keep exact semantics.
    buf_d2 = (min(3, n_tiles + 1) if use_buffered else None)
    dec_grid = pltpu.PrefetchScalarGridSpec(
        num_scalar_prefetch=0,
        grid=(n_tiles,),
        in_specs=[
            _spec((Bp, Hp), lambda i: (0, 0), buffers=buf1),     # y (constant)
            _spec((Hp, tn), lambda i: (0, i), buffers=buf_d2),   # d2 tile
            _spec((1, tn), lambda i: (0, i)),                    # db2 tile
        ],
        out_specs=_spec((Bp, tn), lambda i: (0, i), buffers=buf_d2),  # emb tile
    )
    dec_vmem = _vmem_limit([
        ((Bp, Hp), bf16, 2),
        ((Hp, tn), bf16, 3),
        ((1, tn), f32, 2),
        ((Bp, tn), bf16, 3),
    ])
    emb = pl.pallas_call(
        decoder2_kernel,
        out_shape=jax.ShapeDtypeStruct((Bp, Ep), bf16),
        grid_spec=dec_grid,
        compiler_params=pltpu.CompilerParams(
            # No cross-step carry any more -> tile axis is truly parallel
            # (shards across both TensorCores on v7x).
            dimension_semantics=("parallel",),
            vmem_limit_bytes=dec_vmem,
        ),
    )(y, d2, db2)

    return (mean[:B, :L], log_var[:B, :L], kl[0], latent[:B, :L], emb[:B, :E])


def init_params(key, hidden_size, latent_size, num_soft_token):
    """Synthetic init mirroring the nn.Linear shapes in __init__.
    Weights stored as [in, out] (PyTorch weight transposed); f32 master copy."""
    ks = jax.random.split(key, 5)

    def lin(k, fan_in, fan_out):
        kw, kb = jax.random.split(k)
        scale = 1.0 / jnp.sqrt(jnp.float32(fan_in))
        w = jax.random.uniform(kw, (fan_in, fan_out), jnp.float32, -scale, scale)
        b = jax.random.uniform(kb, (1, fan_out), jnp.float32, -scale, scale)
        return w, b

    w1, b1 = lin(ks[0], hidden_size, hidden_size)
    w2, b2 = lin(ks[1], hidden_size, hidden_size)
    w3, b3 = lin(ks[2], hidden_size, latent_size * 2)
    d1, db1 = lin(ks[3], latent_size, hidden_size)
    d2, db2 = lin(ks[4], hidden_size, hidden_size * num_soft_token)
    return dict(w1=w1, b1=b1, w2=w2, b2=b2, w3=w3, b3=b3,
                d1=d1, db1=db1, d2=d2, db2=db2)


def reference_forward(last_hidden, eps, p):
    """Pure-JAX reference with the same bf16-weight / f32-accumulate recipe."""
    bf16 = jnp.bfloat16

    def dot(x, w):
        return jnp.dot(x.astype(bf16), w.astype(bf16),
                       preferred_element_type=jnp.float32)

    x = jnp.maximum(dot(last_hidden, p["w1"]) + p["b1"], 0.0)
    x = jnp.maximum(dot(x, p["w2"]) + p["b2"], 0.0)
    L = eps.shape[1]
    mean = dot(x, p["w3"][:, :L]) + p["b3"][:, :L]
    log_var = dot(x, p["w3"][:, L:]) + p["b3"][:, L:]
    kl = jnp.mean(0.5 * jnp.mean(jnp.exp(log_var) + mean ** 2 - 1.0 - log_var,
                                 axis=1))
    z = mean + eps * jnp.exp(0.5 * log_var)
    y = jnp.maximum(dot(z, p["d1"]) + p["db1"], 0.0)
    emb = jax.nn.sigmoid(dot(y, p["d2"]) + p["db2"])
    return mean, log_var, kl, z, emb


if __name__ == "__main__":
    # TODO(synk): llm.encode / llm.decode / tokenizer / task_loss / INN flow
    # (WrappedLLM) have no Pallas equivalent; we start from the encoder's last
    # hidden state and stop at the decoder soft-token embedding.
    B, H, L, NST = 2, 32, 8, 8   # batch, hidden_size, latent_size, num_soft_token

    key = jax.random.PRNGKey(0)
    k_h, k_eps, k_p = jax.random.split(key, 3)
    last_hidden = jax.random.normal(k_h, (B, H), jnp.float32)
    eps = jax.random.normal(k_eps, (B, L), jnp.float32)
    params = init_params(k_p, H, L, NST)

    try:
        outs = jax.block_until_ready(nesy_forward(last_hidden, eps, params))
    except Exception:
        # Fallback for JAX versions without BlockSpec pipeline_mode support.
        outs = jax.block_until_ready(
            nesy_forward(last_hidden, eps, params, use_buffered=False))

    refs = reference_forward(last_hidden, eps, params)

    names = ("mean", "log_var", "kl", "latent", "emb")
    tols = {"mean": 1e-3, "log_var": 1e-3, "kl": 1e-3, "latent": 1e-3,
            "emb": 1e-2}   # emb is returned in bf16 (halved writeback DMA)
    for name, o, r in zip(names, outs, refs):
        o = jnp.asarray(o, jnp.float32)
        r = jnp.asarray(r, jnp.float32)
        assert jnp.allclose(o, r, atol=tols[name], rtol=tols[name]), \
            f"{name} mismatch vs reference"

    print("KERNEL_OK")
</pallas_src>

<mosaic_0001>
module attributes {stable_mosaic.version = 11 : i64} {
  func.func @encoder_kernel(%arg0: i32, %arg1: memref<8x128xbf16, #tpu.memory_space<vmem>>, %arg2: memref<8x128xf32, #tpu.memory_space<vmem>>, %arg3: memref<128x128xbf16, #tpu.memory_space<vmem>>, %arg4: memref<1x128xf32, #tpu.memory_space<vmem>>, %arg5: memref<128x128xbf16, #tpu.memory_space<vmem>>, %arg6: memref<1x128xf32, #tpu.memory_space<vmem>>, %arg7: memref<128x128xbf16, #tpu.memory_space<vmem>>, %arg8: memref<1x128xf32, #tpu.memory_space<vmem>>, %arg9: memref<128x128xbf16, #tpu.memory_space<vmem>>, %arg10: memref<1x128xf32, #tpu.memory_space<vmem>>, %arg11: memref<128x128xbf16, #tpu.memory_space<vmem>>, %arg12: memref<1x128xf32, #tpu.memory_space<vmem>>, %arg13: memref<8x128xf32, #tpu.memory_space<vmem>>, %arg14: memref<8x128xf32, #tpu.memory_space<vmem>>, %arg15: memref<1xf32, #tpu.memory_space<smem>>, %arg16: memref<8x128xf32, #tpu.memory_space<vmem>>, %arg17: memref<8x128xbf16, #tpu.memory_space<vmem>>) attributes {dimension_semantics = [#tpu.dimension_semantics<arbitrary>], iteration_bounds = array<i64: 1>, scalar_prefetch = 0 : i64, scratch_operands = 0 : i64, tpu.core_type = #tpu.core_type<tc>, window_params = [{pipeline_mode = #tpu.pipeline_mode<synchronous>, transform_indices = @transform_0, window_bounds = array<i64: 8, 128>}, {pipeline_mode = #tpu.pipeline_mode<synchronous>, transform_indices = @transform_1, window_bounds = array<i64: 8, 128>}, {pipeline_mode = #tpu.pipeline_mode<synchronous>, transform_indices = @transform_2, window_bounds = array<i64: 128, 128>}, {pipeline_mode = #tpu.pipeline_mode<synchronous>, transform_indices = @transform_3, window_bounds = array<i64: 1, 128>}, {pipeline_mode = #tpu.pipeline_mode<synchronous>, transform_indices = @transform_4, window_bounds = array<i64: 128, 128>}, {pipeline_mode = #tpu.pipeline_mode<synchronous>, transform_indices = @transform_5, window_bounds = array<i64: 1, 128>}, {pipeline_mode = #tpu.pipeline_mode<synchronous>, transform_indices = @transform_6, window_bounds = array<i64: 128, 128>}, {pipeline_mode = #tpu.pipeline_mode<synchronous>, transform_indices = @transform_7, window_bounds = array<i64: 1, 128>}, {pipeline_mode = #tpu.pipeline_mode<synchronous>, transform_indices = @transform_8, window_bounds = array<i64: 128, 128>}, {pipeline_mode = #tpu.pipeline_mode<synchronous>, transform_indices = @transform_9, window_bounds = array<i64: 1, 128>}, {pipeline_mode = #tpu.pipeline_mode<synchronous>, transform_indices = @transform_10, window_bounds = array<i64: 128, 128>}, {pipeline_mode = #tpu.pipeline_mode<synchronous>, transform_indices = @transform_11, window_bounds = array<i64: 1, 128>}, {pipeline_mode = #tpu.pipeline_mode<synchronous>, transform_indices = @transform_12, window_bounds = array<i64: 8, 128>}, {pipeline_mode = #tpu.pipeline_mode<synchronous>, transform_indices = @transform_13, window_bounds = array<i64: 8, 128>}, {transform_indices = @transform_14, window_bounds = array<i64: 1>}, {pipeline_mode = #tpu.pipeline_mode<synchronous>, transform_indices = @transform_15, window_bounds = array<i64: 8, 128>}, {pipeline_mode = #tpu.pipeline_mode<synchronous>, transform_indices = @transform_16, window_bounds = array<i64: 8, 128>}]} {
    %c0 = arith.constant 0 : index
    %c0_0 = arith.constant 0 : index
    %0 = vector.load %arg1[%c0, %c0_0] : memref<8x128xbf16, #tpu.memory_space<vmem>>, vector<8x128xbf16>
    %c0_1 = arith.constant 0 : index
    %c0_2 = arith.constant 0 : index
    %1 = vector.load %arg3[%c0_1, %c0_2] : memref<128x128xbf16, #tpu.memory_space<vmem>>, vector<128x128xbf16>
    %cst = arith.constant dense<0.000000e+00> : vector<8x128xf32>
    %2 = tpu.matmul %0, %1, %cst {dimension_numbers = #tpu.dot_dimension_numbers<[1], [0], [0], [1], [0, 0, 1, 1], [], []>} : vector<8x128xbf16>, vector<128x128xbf16>, vector<8x128xf32> -> vector<8x128xf32>
    %c0_3 = arith.constant 0 : index
    %c0_4 = arith.constant 0 : index
    %3 = vector.load %arg4[%c0_3, %c0_4] : memref<1x128xf32, #tpu.memory_space<vmem>>, vector<1x128xf32>
    %4 = vector.broadcast %3 : vector<1x128xf32> to vector<8x128xf32>
    %5 = arith.addf %2, %4 : vector<8x128xf32>
    %cst_5 = arith.constant 0.000000e+00 : f32
    %6 = vector.broadcast %cst_5 : f32 to vector<8x128xf32>
    %7 = arith.maximumf %5, %6 : vector<8x128xf32>
    %8 = arith.truncf %7 : vector<8x128xf32> to vector<8x128xbf16>
    %c0_6 = arith.constant 0 : index
    %c0_7 = arith.constant 0 : index
    %9 = vector.load %arg5[%c0_6, %c0_7] : memref<128x128xbf16, #tpu.memory_space<vmem>>, vector<128x128xbf16>
    %cst_8 = arith.constant dense<0.000000e+00> : vector<8x128xf32>
    %10 = tpu.matmul %8, %9, %cst_8 {dimension_numbers = #tpu.dot_dimension_numbers<[1], [0], [0], [1], [0, 0, 1, 1], [], []>} : vector<8x128xbf16>, vector<128x128xbf16>, vector<8x128xf32> -> vector<8x128xf32>
    %c0_9 = arith.constant 0 : index
    %c0_10 = arith.constant 0 : index
    %11 = vector.load %arg6[%c0_9, %c0_10] : memref<1x128xf32, #tpu.memory_space<vmem>>, vector<1x128xf32>
    %12 = vector.broadcast %11 : vector<1x128xf32> to vector<8x128xf32>
    %13 = arith.addf %10, %12 : vector<8x128xf32>
    %cst_11 = arith.constant 0.000000e+00 : f32
    %14 = vector.broadcast %cst_11 : f32 to vector<8x128xf32>
    %15 = arith.maximumf %13, %14 : vector<8x128xf32>
    %16 = arith.truncf %15 : vector<8x128xf32> to vector<8x128xbf16>
    %c0_12 = arith.constant 0 : index
    %c0_13 = arith.constant 0 : index
    %17 = vector.load %arg7[%c0_12, %c0_13] : memref<128x128xbf16, #tpu.memory_space<vmem>>, vector<128x128xbf16>
    %cst_14 = arith.constant dense<0.000000e+00> : vector<8x128xf32>
    %18 = tpu.matmul %16, %17, %cst_14 {dimension_numbers = #tpu.dot_dimension_numbers<[1], [0], [0], [1], [0, 0, 1, 1], [], []>} : vector<8x128xbf16>, vector<128x128xbf16>, vector<8x128xf32> -> vector<8x128xf32>
    %c0_15 = arith.constant 0 : index
    %c0_16 = arith.constant 0 : index
    %19 = vector.load %arg8[%c0_15, %c0_16] : memref<1x128xf32, #tpu.memory_space<vmem>>, vector<1x128xf32>
    %20 = vector.broadcast %19 : vector<1x128xf32> to vector<8x128xf32>
    %21 = arith.addf %18, %20 : vector<8x128xf32>
    %c0_17 = arith.constant 0 : index
    %c0_18 = arith.constant 0 : index
    %22 = vector.load %arg9[%c0_17, %c0_18] : memref<128x128xbf16, #tpu.memory_space<vmem>>, vector<128x128xbf16>
    %cst_19 = arith.constant dense<0.000000e+00> : vector<8x128xf32>
    %23 = tpu.matmul %16, %22, %cst_19 {dimension_numbers = #tpu.dot_dimension_numbers<[1], [0], [0], [1], [0, 0, 1, 1], [], []>} : vector<8x128xbf16>, vector<128x128xbf16>, vector<8x128xf32> -> vector<8x128xf32>
    %c0_20 = arith.constant 0 : index
    %c0_21 = arith.constant 0 : index
    %24 = vector.load %arg10[%c0_20, %c0_21] : memref<1x128xf32, #tpu.memory_space<vmem>>, vector<1x128xf32>
    %25 = vector.broadcast %24 : vector<1x128xf32> to vector<8x128xf32>
    %26 = arith.addf %23, %25 : vector<8x128xf32>
    %c0_22 = arith.constant 0 : index
    %c0_23 = arith.constant 0 : index
    %27 = vector.load %arg13[%c0_22, %c0_23] : memref<8x128xf32, #tpu.memory_space<vmem>>, vector<8x128xf32>
    tpu.vector_store %arg13[%c0_22, %c0_23], %21 {strides = array<i32>} : memref<8x128xf32, #tpu.memory_space<vmem>>, vector<8x128xf32>,
    %c0_24 = arith.constant 0 : index
    %c0_25 = arith.constant 0 : index
    %28 = vector.load %arg14[%c0_24, %c0_25] : memref<8x128xf32, #tpu.memory_space<vmem>>, vector<8x128xf32>
    tpu.vector_store %arg14[%c0_24, %c0_25], %26 {strides = array<i32>} : memref<8x128xf32, #tpu.memory_space<vmem>>, vector<8x128xf32>,
    %29 = math.exp %26 : vector<8x128xf32>
    %30 = arith.mulf %21, %21 : vector<8x128xf32>
    %31 = arith.addf %29, %30 : vector<8x128xf32>
    %cst_26 = arith.constant 1.000000e+00 : f32
    %32 = vector.broadcast %cst_26 : f32 to vector<8x128xf32>
    %33 = arith.subf %31, %32 : vector<8x128xf32>
    %34 = arith.subf %33, %26 : vector<8x128xf32>
    %cst_27 = arith.constant dense<0.000000e+00> : vector<8xf32>
    %35 = vector.multi_reduction <add>, %34, %cst_27 [1] : vector<8x128xf32> to vector<8xf32>
    %36 = vector.shape_cast %35 : vector<8xf32> to vector<8x1xf32>
    %cst_28 = arith.constant 5.000000e-01 : f32
    %37 = vector.broadcast %cst_28 : f32 to vector<8x1xf32>
    %38 = arith.mulf %37, %36 : vector<8x1xf32>
    %cst_29 = arith.constant 1.250000e-01 : f32
    %39 = vector.broadcast %cst_29 : f32 to vector<8x1xf32>
    %40 = arith.mulf %38, %39 : vector<8x1xf32>
    %41 = tpu.iota {dimensions = array<i32: 0>} : vector<8x1xi32>
    %c2_i32 = arith.constant 2 : i32
    %42 = vector.broadcast %c2_i32 : i32 to vector<8x1xi32>
    %43 = arith.cmpi slt, %41, %42 : vector<8x1xi32>
    %cst_30 = arith.constant 0.000000e+00 : f32
    %44 = vector.broadcast %cst_30 : f32 to vector<8x1xf32>
    %45 = arith.select %43, %40, %44 : vector<8x1xi1>, vector<8x1xf32>
    %46 = vector.shape_cast %45 : vector<8x1xf32> to vector<1x8x1xf32>
    %cst_31 = arith.constant dense<0.000000e+00> : vector<1xf32>
    %47 = vector.multi_reduction <add>, %46, %cst_31 [1, 2] : vector<1x8x1xf32> to vector<1xf32>
    %48 = vector.shape_cast %47 : vector<1xf32> to vector<1x1x1xf32>
    %49 = vector.extract %48[0, 0, 0] : f32 from vector<1x1x1xf32>
    %cst_32 = arith.constant 5.000000e-01 : f32
    %50 = arith.mulf %49, %cst_32 : f32
    %c0_33 = arith.constant 0 : index
    %51 = memref.load %arg15[%c0_33] : memref<1xf32, #tpu.memory_space<smem>>
    memref.store %50, %arg15[%c0_33] : memref<1xf32, #tpu.memory_space<smem>>
    %c0_34 = arith.constant 0 : index
    %c0_35 = arith.constant 0 : index
    %52 = vector.load %arg2[%c0_34, %c0_35] : memref<8x128xf32, #tpu.memory_space<vmem>>, vector<8x128xf32>
    %cst_36 = arith.constant 5.000000e-01 : f32
    %53 = vector.broadcast %cst_36 : f32 to vector<8x128xf32>
    %54 = arith.mulf %53, %26 : vector<8x128xf32>
    %55 = math.exp %54 : vector<8x128xf32>
    %56 = arith.mulf %52, %55 : vector<8x128xf32>
    %57 = arith.addf %21, %56 : vector<8x128xf32>
    %c0_37 = arith.constant 0 : index
    %c0_38 = arith.constant 0 : index
    %58 = vector.load %arg16[%c0_37, %c0_38] : memref<8x128xf32, #tpu.memory_space<vmem>>, vector<8x128xf32>
    tpu.vector_store %arg16[%c0_37, %c0_38], %57 {strides = array<i32>} : memref<8x128xf32, #tpu.memory_space<vmem>>, vector<8x128xf32>,
    %59 = arith.truncf %57 : vector<8x128xf32> to vector<8x128xbf16>
    %c0_39 = arith.constant 0 : index
    %c0_40 = arith.constant 0 : index
    %60 = vector.load %arg11[%c0_39, %c0_40] : memref<128x128xbf16, #tpu.memory_space<vmem>>, vector<128x128xbf16>
    %cst_41 = arith.constant dense<0.000000e+00> : vector<8x128xf32>
    %61 = tpu.matmul %59, %60, %cst_41 {dimension_numbers = #tpu.dot_dimension_numbers<[1], [0], [0], [1], [0, 0, 1, 1], [], []>} : vector<8x128xbf16>, vector<128x128xbf16>, vector<8x128xf32> -> vector<8x128xf32>
    %c0_42 = arith.constant 0 : index
    %c0_43 = arith.constant 0 : index
    %62 = vector.load %arg12[%c0_42, %c0_43] : memref<1x128xf32, #tpu.memory_space<vmem>>, vector<1x128xf32>
    %63 = vector.broadcast %62 : vector<1x128xf32> to vector<8x128xf32>
    %64 = arith.addf %61, %63 : vector<8x128xf32>
    %cst_44 = arith.constant 0.000000e+00 : f32
    %65 = vector.broadcast %cst_44 : f32 to vector<8x128xf32>
    %66 = arith.maximumf %64, %65 : vector<8x128xf32>
    %67 = arith.truncf %66 : vector<8x128xf32> to vector<8x128xbf16>
    %c0_45 = arith.constant 0 : index
    %c0_46 = arith.constant 0 : index
    %68 = vector.load %arg17[%c0_45, %c0_46] : memref<8x128xbf16, #tpu.memory_space<vmem>>, vector<8x128xbf16>
    tpu.vector_store %arg17[%c0_45, %c0_46], %67 {strides = array<i32>} : memref<8x128xbf16, #tpu.memory_space<vmem>>, vector<8x128xbf16>,
    return
  }
  func.func @transform_0(%arg0: i32) -> (i32, i32) {
    %c0_i32 = arith.constant 0 : i32
    %c0_i32_0 = arith.constant 0 : i32
    %c0_i32_1 = arith.constant 0 : i32
    return %c0_i32, %c0_i32_0 : i32, i32
  }
  func.func @transform_1(%arg0: i32) -> (i32, i32) {
    %c0_i32 = arith.constant 0 : i32
    %c0_i32_0 = arith.constant 0 : i32
    %c0_i32_1 = arith.constant 0 : i32
    return %c0_i32, %c0_i32_0 : i32, i32
  }
  func.func @transform_2(%arg0: i32) -> (i32, i32) {
    %c0_i32 = arith.constant 0 : i32
    %c0_i32_0 = arith.constant 0 : i32
    %c0_i32_1 = arith.constant 0 : i32
    return %c0_i32, %c0_i32_0 : i32, i32
  }
  func.func @transform_3(%arg0: i32) -> (i32, i32) {
    %c0_i32 = arith.constant 0 : i32
    %c0_i32_0 = arith.constant 0 : i32
    %c0_i32_1 = arith.constant 0 : i32
    return %c0_i32, %c0_i32_0 : i32, i32
  }
  func.func @transform_4(%arg0: i32) -> (i32, i32) {
    %c0_i32 = arith.constant 0 : i32
    %c0_i32_0 = arith.constant 0 : i32
    %c0_i32_1 = arith.constant 0 : i32
    return %c0_i32, %c0_i32_0 : i32, i32
  }
  func.func @transform_5(%arg0: i32) -> (i32, i32) {
    %c0_i32 = arith.constant 0 : i32
    %c0_i32_0 = arith.constant 0 : i32
    %c0_i32_1 = arith.constant 0 : i32
    return %c0_i32, %c0_i32_0 : i32, i32
  }
  func.func @transform_6(%arg0: i32) -> (i32, i32) {
    %c0_i32 = arith.constant 0 : i32
    %c0_i32_0 = arith.constant 0 : i32
    %c0_i32_1 = arith.constant 0 : i32
    return %c0_i32, %c0_i32_0 : i32, i32
  }
  func.func @transform_7(%arg0: i32) -> (i32, i32) {
    %c0_i32 = arith.constant 0 : i32
    %c0_i32_0 = arith.constant 0 : i32
    %c0_i32_1 = arith.constant 0 : i32
    return %c0_i32, %c0_i32_0 : i32, i32
  }
  func.func @transform_8(%arg0: i32) -> (i32, i32) {
    %c0_i32 = arith.constant 0 : i32
    %c0_i32_0 = arith.constant 0 : i32
    %c0_i32_1 = arith.constant 0 : i32
    return %c0_i32, %c0_i32_0 : i32, i32
  }
  func.func @transform_9(%arg0: i32) -> (i32, i32) {
    %c0_i32 = arith.constant 0 : i32
    %c0_i32_0 = arith.constant 0 : i32
    %c0_i32_1 = arith.constant 0 : i32
    return %c0_i32, %c0_i32_0 : i32, i32
  }
  func.func @transform_10(%arg0: i32) -> (i32, i32) {
    %c0_i32 = arith.constant 0 : i32
    %c0_i32_0 = arith.constant 0 : i32
    %c0_i32_1 = arith.constant 0 : i32
    return %c0_i32, %c0_i32_0 : i32, i32
  }
  func.func @transform_11(%arg0: i32) -> (i32, i32) {
    %c0_i32 = arith.constant 0 : i32
    %c0_i32_0 = arith.constant 0 : i32
    %c0_i32_1 = arith.constant 0 : i32
    return %c0_i32, %c0_i32_0 : i32, i32
  }
  func.func @transform_12(%arg0: i32) -> (i32, i32) {
    %c0_i32 = arith.constant 0 : i32
    %c0_i32_0 = arith.constant 0 : i32
    %c0_i32_1 = arith.constant 0 : i32
    return %c0_i32, %c0_i32_0 : i32, i32
  }
  func.func @transform_13(%arg0: i32) -> (i32, i32) {
    %c0_i32 = arith.constant 0 : i32
    %c0_i32_0 = arith.constant 0 : i32
    %c0_i32_1 = arith.constant 0 : i32
    return %c0_i32, %c0_i32_0 : i32, i32
  }
  func.func @transform_14(%arg0: i32) -> i32 {
    %c0_i32 = arith.constant 0 : i32
    %c0_i32_0 = arith.constant 0 : i32
    return %c0_i32 : i32
  }
  func.func @transform_15(%arg0: i32) -> (i32, i32) {
    %c0_i32 = arith.constant 0 : i32
    %c0_i32_0 = arith.constant 0 : i32
    %c0_i32_1 = arith.constant 0 : i32
    return %c0_i32, %c0_i32_0 : i32, i32
  }
  func.func @transform_16(%arg0: i32) -> (i32, i32) {
    %c0_i32 = arith.constant 0 : i32
    %c0_i32_0 = arith.constant 0 : i32
    %c0_i32_1 = arith.constant 0 : i32
    return %c0_i32, %c0_i32_0 : i32, i32
  }
}

module attributes {stable_mosaic.version = 11 : i64} {
  func.func @encoder_kernel(%arg0: i32, %arg1: memref<8x128xbf16, #tpu.memory_space<vmem>>, %arg2: memref<8x128xf32, #tpu.memory_space<vmem>>, %arg3: memref<128x128xbf16, #tpu.memory_space<vmem>>, %arg4: memref<1x128xf32, #tpu.memory_space<vmem>>, %arg5: memref<128x128xbf16, #tpu.memory_space<vmem>>, %arg6: memref<1x128xf32, #tpu.memory_space<vmem>>, %arg7: memref<128x128xbf16, #tpu.memory_space<vmem>>, %arg8: memref<1x128xf32, #tpu.memory_space<vmem>>, %arg9: memref<128x128xbf16, #tpu.memory_space<vmem>>, %arg10: memref<1x128xf32, #tpu.memory_space<vmem>>, %arg11: memref<128x128xbf16, #tpu.memory_space<vmem>>, %arg12: memref<1x128xf32, #tpu.memory_space<vmem>>, %arg13: memref<8x128xf32, #tpu.memory_space<vmem>>, %arg14: memref<8x128xf32, #tpu.memory_space<vmem>>, %arg15: memref<1xf32, #tpu.memory_space<smem>>, %arg16: memref<8x128xf32, #tpu.memory_space<vmem>>, %arg17: memref<8x128xbf16, #tpu.memory_space<vmem>>) attributes {dimension_semantics = [#tpu.dimension_semantics<arbitrary>], iteration_bounds = array<i64: 1>, scalar_prefetch = 0 : i64, scratch_operands = 0 : i64, tpu.core_type = #tpu.core_type<tc>, window_params = [{pipeline_mode = #tpu.pipeline_mode<synchronous>, transform_indices = @transform_0, window_bounds = array<i64: 8, 128>}, {pipeline_mode = #tpu.pipeline_mode<synchronous>, transform_indices = @transform_1, window_bounds = array<i64: 8, 128>}, {pipeline_mode = #tpu.pipeline_mode<synchronous>, transform_indices = @transform_2, window_bounds = array<i64: 128, 128>}, {pipeline_mode = #tpu.pipeline_mode<synchronous>, transform_indices = @transform_3, window_bounds = array<i64: 1, 128>}, {pipeline_mode = #tpu.pipeline_mode<synchronous>, transform_indices = @transform_4, window_bounds = array<i64: 128, 128>}, {pipeline_mode = #tpu.pipeline_mode<synchronous>, transform_indices = @transform_5, window_bounds = array<i64: 1, 128>}, {pipeline_mode = #tpu.pipeline_mode<synchronous>, transform_indices = @transform_6, window_bounds = array<i64: 128, 128>}, {pipeline_mode = #tpu.pipeline_mode<synchronous>, transform_indices = @transform_7, window_bounds = array<i64: 1, 128>}, {pipeline_mode = #tpu.pipeline_mode<synchronous>, transform_indices = @transform_8, window_bounds = array<i64: 128, 128>}, {pipeline_mode = #tpu.pipeline_mode<synchronous>, transform_indices = @transform_9, window_bounds = array<i64: 1, 128>}, {pipeline_mode = #tpu.pipeline_mode<synchronous>, transform_indices = @transform_10, window_bounds = array<i64: 128, 128>}, {pipeline_mode = #tpu.pipeline_mode<synchronous>, transform_indices = @transform_11, window_bounds = array<i64: 1, 128>}, {pipeline_mode = #tpu.pipeline_mode<synchronous>, transform_indices = @transform_12, window_bounds = array<i64: 8, 128>}, {pipeline_mode = #tpu.pipeline_mode<synchronous>, transform_indices = @transform_13, window_bounds = array<i64: 8, 128>}, {transform_indices = @transform_14, window_bounds = array<i64: 1>}, {pipeline_mode = #tpu.pipeline_mode<synchronous>, transform_indices = @transform_15, window_bounds = array<i64: 8, 128>}, {pipeline_mode = #tpu.pipeline_mode<synchronous>, transform_indices = @transform_16, window_bounds = array<i64: 8, 128>}]} {
    %c0 = arith.constant 0 : index
    %c0_0 = arith.constant 0 : index
    %0 = vector.load %arg1[%c0, %c0_0] : memref<8x128xbf16, #tpu.memory_space<vmem>>, vector<8x128xbf16>
    %c0_1 = arith.constant 0 : index
    %c0_2 = arith.constant 0 : index
    %1 = vector.load %arg3[%c0_1, %c0_2] : memref<128x128xbf16, #tpu.memory_space<vmem>>, vector<128x128xbf16>
    %cst = arith.constant dense<0.000000e+00> : vector<8x128xf32>
    %2 = tpu.matmul %0, %1, %cst {dimension_numbers = #tpu.dot_dimension_numbers<[1], [0], [0], [1], [0, 0, 1, 1], [], []>} : vector<8x128xbf16>, vector<128x128xbf16>, vector<8x128xf32> -> vector<8x128xf32>
    %c0_3 = arith.constant 0 : index
    %c0_4 = arith.constant 0 : index
    %3 = vector.load %arg4[%c0_3, %c0_4] : memref<1x128xf32, #tpu.memory_space<vmem>>, vector<1x128xf32>
    %4 = vector.broadcast %3 : vector<1x128xf32> to vector<8x128xf32>
    %5 = arith.addf %2, %4 : vector<8x128xf32>
    %cst_5 = arith.constant 0.000000e+00 : f32
    %6 = vector.broadcast %cst_5 : f32 to vector<8x128xf32>
    %7 = arith.maximumf %5, %6 : vector<8x128xf32>
    %8 = arith.truncf %7 : vector<8x128xf32> to vector<8x128xbf16>
    %c0_6 = arith.constant 0 : index
    %c0_7 = arith.constant 0 : index
    %9 = vector.load %arg5[%c0_6, %c0_7] : memref<128x128xbf16, #tpu.memory_space<vmem>>, vector<128x128xbf16>
    %cst_8 = arith.constant dense<0.000000e+00> : vector<8x128xf32>
    %10 = tpu.matmul %8, %9, %cst_8 {dimension_numbers = #tpu.dot_dimension_numbers<[1], [0], [0], [1], [0, 0, 1, 1], [], []>} : vector<8x128xbf16>, vector<128x128xbf16>, vector<8x128xf32> -> vector<8x128xf32>
    %c0_9 = arith.constant 0 : index
    %c0_10 = arith.constant 0 : index
    %11 = vector.load %arg6[%c0_9, %c0_10] : memref<1x128xf32, #tpu.memory_space<vmem>>, vector<1x128xf32>
    %12 = vector.broadcast %11 : vector<1x128xf32> to vector<8x128xf32>
    %13 = arith.addf %10, %12 : vector<8x128xf32>
    %cst_11 = arith.constant 0.000000e+00 : f32
    %14 = vector.broadcast %cst_11 : f32 to vector<8x128xf32>
    %15 = arith.maximumf %13, %14 : vector<8x128xf32>
    %16 = arith.truncf %15 : vector<8x128xf32> to vector<8x128xbf16>
    %c0_12 = arith.constant 0 : index
    %c0_13 = arith.constant 0 : index
    %17 = vector.load %arg7[%c0_12, %c0_13] : memref<128x128xbf16, #tpu.memory_space<vmem>>, vector<128x128xbf16>
    %cst_14 = arith.constant dense<0.000000e+00> : vector<8x128xf32>
    %18 = tpu.matmul %16, %17, %cst_14 {dimension_numbers = #tpu.dot_dimension_numbers<[1], [0], [0], [1], [0, 0, 1, 1], [], []>} : vector<8x128xbf16>, vector<128x128xbf16>, vector<8x128xf32> -> vector<8x128xf32>
    %c0_15 = arith.constant 0 : index
    %c0_16 = arith.constant 0 : index
    %19 = vector.load %arg8[%c0_15, %c0_16] : memref<1x128xf32, #tpu.memory_space<vmem>>, vector<1x128xf32>
    %20 = vector.broadcast %19 : vector<1x128xf32> to vector<8x128xf32>
    %21 = arith.addf %18, %20 : vector<8x128xf32>
    %c0_17 = arith.constant 0 : index
    %c0_18 = arith.constant 0 : index
    %22 = vector.load %arg9[%c0_17, %c0_18] : memref<128x128xbf16, #tpu.memory_space<vmem>>, vector<128x128xbf16>
    %cst_19 = arith.constant dense<0.000000e+00> : vector<8x128xf32>
    %23 = tpu.matmul %16, %22, %cst_19 {dimension_numbers = #tpu.dot_dimension_numbers<[1], [0], [0], [1], [0, 0, 1, 1], [], []>} : vector<8x128xbf16>, vector<128x128xbf16>, vector<8x128xf32> -> vector<8x128xf32>
    %c0_20 = arith.constant 0 : index
    %c0_21 = arith.constant 0 : index
    %24 = vector.load %arg10[%c0_20, %c0_21] : memref<1x128xf32, #tpu.memory_space<vmem>>, vector<1x128xf32>
    %25 = vector.broadcast %24 : vector<1x128xf32> to vector<8x128xf32>
    %26 = arith.addf %23, %25 : vector<8x128xf32>
    %c0_22 = arith.constant 0 : index
    %c0_23 = arith.constant 0 : index
    %27 = vector.load %arg13[%c0_22, %c0_23] : memref<8x128xf32, #tpu.memory_space<vmem>>, vector<8x128xf32>
    tpu.vector_store %arg13[%c0_22, %c0_23], %21 {strides = array<i32>} : memref<8x128xf32, #tpu.memory_space<vmem>>, vector<8x128xf32>,
    %c0_24 = arith.constant 0 : index
    %c0_25 = arith.constant 0 : index
    %28 = vector.load %arg14[%c0_24, %c0_25] : memref<8x128xf32, #tpu.memory_space<vmem>>, vector<8x128xf32>
    tpu.vector_store %arg14[%c0_24, %c0_25], %26 {strides = array<i32>} : memref<8x128xf32, #tpu.memory_space<vmem>>, vector<8x128xf32>,
    %29 = math.exp %26 : vector<8x128xf32>
    %30 = arith.mulf %21, %21 : vector<8x128xf32>
    %31 = arith.addf %29, %30 : vector<8x128xf32>
    %cst_26 = arith.constant 1.000000e+00 : f32
    %32 = vector.broadcast %cst_26 : f32 to vector<8x128xf32>
    %33 = arith.subf %31, %32 : vector<8x128xf32>
    %34 = arith.subf %33, %26 : vector<8x128xf32>
    %cst_27 = arith.constant dense<0.000000e+00> : vector<8xf32>
    %35 = vector.multi_reduction <add>, %34, %cst_27 [1] : vector<8x128xf32> to vector<8xf32>
    %36 = vector.shape_cast %35 : vector<8xf32> to vector<8x1xf32>
    %cst_28 = arith.constant 5.000000e-01 : f32
    %37 = vector.broadcast %cst_28 : f32 to vector<8x1xf32>
    %38 = arith.mulf %37, %36 : vector<8x1xf32>
    %cst_29 = arith.constant 1.250000e-01 : f32
    %39 = vector.broadcast %cst_29 : f32 to vector<8x1xf32>
    %40 = arith.mulf %38, %39 : vector<8x1xf32>
    %41 = tpu.iota {dimensions = array<i32: 0>} : vector<8x1xi32>
    %c2_i32 = arith.constant 2 : i32
    %42 = vector.broadcast %c2_i32 : i32 to vector<8x1xi32>
    %43 = arith.cmpi slt, %41, %42 : vector<8x1xi32>
    %cst_30 = arith.constant 0.000000e+00 : f32
    %44 = vector.broadcast %cst_30 : f32 to vector<8x1xf32>
    %45 = arith.select %43, %40, %44 : vector<8x1xi1>, vector<8x1xf32>
    %46 = vector.shape_cast %45 : vector<8x1xf32> to vector<1x8x1xf32>
    %cst_31 = arith.constant dense<0.000000e+00> : vector<1xf32>
    %47 = vector.multi_reduction <add>, %46, %cst_31 [1, 2] : vector<1x8x1xf32> to vector<1xf32>
    %48 = vector.shape_cast %47 : vector<1xf32> to vector<1x1x1xf32>
    %49 = vector.extract %48[0, 0, 0] : f32 from vector<1x1x1xf32>
    %cst_32 = arith.constant 5.000000e-01 : f32
    %50 = arith.mulf %49, %cst_32 : f32
    %c0_33 = arith.constant 0 : index
    %51 = memref.load %arg15[%c0_33] : memref<1xf32, #tpu.memory_space<smem>>
    memref.store %50, %arg15[%c0_33] : memref<1xf32, #tpu.memory_space<smem>>
    %c0_34 = arith.constant 0 : index
    %c0_35 = arith.constant 0 : index
    %52 = vector.load %arg2[%c0_34, %c0_35] : memref<8x128xf32, #tpu.memory_space<vmem>>, vector<8x128xf32>
    %cst_36 = arith.constant 5.000000e-01 : f32
    %53 = vector.broadcast %cst_36 : f32 to vector<8x128xf32>
    %54 = arith.mulf %53, %26 : vector<8x128xf32>
    %55 = math.exp %54 : vector<8x128xf32>
    %56 = arith.mulf %52, %55 : vector<8x128xf32>
    %57 = arith.addf %21, %56 : vector<8x128xf32>
    %c0_37 = arith.constant 0 : index
    %c0_38 = arith.constant 0 : index
    %58 = vector.load %arg16[%c0_37, %c0_38] : memref<8x128xf32, #tpu.memory_space<vmem>>, vector<8x128xf32>
    tpu.vector_store %arg16[%c0_37, %c0_38], %57 {strides = array<i32>} : memref<8x128xf32, #tpu.memory_space<vmem>>, vector<8x128xf32>,
    %59 = arith.truncf %57 : vector<8x128xf32> to vector<8x128xbf16>
    %c0_39 = arith.constant 0 : index
    %c0_40 = arith.constant 0 : index
    %60 = vector.load %arg11[%c0_39, %c0_40] : memref<128x128xbf16, #tpu.memory_space<vmem>>, vector<128x128xbf16>
    %cst_41 = arith.constant dense<0.000000e+00> : vector<8x128xf32>
    %61 = tpu.matmul %59, %60, %cst_41 {dimension_numbers = #tpu.dot_dimension_numbers<[1], [0], [0], [1], [0, 0, 1, 1], [], []>} : vector<8x128xbf16>, vector<128x128xbf16>, vector<8x128xf32> -> vector<8x128xf32>
    %c0_42 = arith.constant 0 : index
    %c0_43 = arith.constant 0 : index
    %62 = vector.load %arg12[%c0_42, %c0_43] : memref<1x128xf32, #tpu.memory_space<vmem>>, vector<1x128xf32>
    %63 = vector.broadcast %62 : vector<1x128xf32> to vector<8x128xf32>
    %64 = arith.addf %61, %63 : vector<8x128xf32>
    %cst_44 = arith.constant 0.000000e+00 : f32
    %65 = vector.broadcast %cst_44 : f32 to vector<8x128xf32>
    %66 = arith.maximumf %64, %65 : vector<8x128xf32>
    %67 = arith.truncf %66 : vector<8x128xf32> to vector<8x128xbf16>
    %c0_45 = arith.constant 0 : index
    %c0_46 = arith.constant 0 : index
    %68 = vector.load %arg17[%c0_45, %c0_46] : memref<8x128xbf16, #tpu.memory_space<vmem>>, vector<8x128xbf16>
    tpu.vector_store %arg17[%c0_45, %c0_46], %67 {strides = array<i32>} : memref<8x128xbf16, #tpu.memory_space<vmem>>, vector<8x128xbf16>,
    return
  }
  func.func @transform_0(%arg0: i32) -> (i32, i32) {
    %c0_i32 = arith.constant 0 : i32
    %c0_i32_0 = arith.constant 0 : i32
    %c0_i32_1 = arith.constant 0 : i32
    return %c0_i32, %c0_i32_0 : i32, i32
  }
  func.func @transform_1(%arg0: i32) -> (i32, i32) {
    %c0_i32 = arith.constant 0 : i32
    %c0_i32_0 = arith.constant 0 : i32
    %c0_i32_1 = arith.constant 0 : i32
    return %c0_i32, %c0_i32_0 : i32, i32
  }
  func.func @transform_2(%arg0: i32) -> (i32, i32) {
    %c0_i32 = arith.constant 0 : i32
    %c0_i32_0 = arith.constant 0 : i32
    %c0_i32_1 = arith.constant 0 : i32
    return %c0_i32, %c0_i32_0 : i32, i32
  }
  func.func @transform_3(%arg0: i32) -> (i32, i32) {
    %c0_i32 = arith.constant 0 : i32
    %c0_i32_0 = arith.constant 0 : i32
    %c0_i32_1 = arith.constant 0 : i32
    return %c0_i32, %c0_i32_0 : i32, i32
  }
  func.func @transform_4(%arg0: i32) -> (i32, i32) {
    %c0_i32 = arith.constant 0 : i32
    %c0_i32_0 = arith.constant 0 : i32
    %c0_i32_1 = arith.constant 0 : i32
    return %c0_i32, %c0_i32_0 : i32, i32
  }
  func.func @transform_5(%arg0: i32) -> (i32, i32) {
    %c0_i32 = arith.constant 0 : i32
    %c0_i32_0 = arith.constant 0 : i32
    %c0_i32_1 = arith.constant 0 : i32
    return %c0_i32, %c0_i32_0 : i32, i32
  }
  func.func @transform_6(%arg0: i32) -> (i32, i32) {
    %c0_i32 = arith.constant 0 : i32
    %c0_i32_0 = arith.constant 0 : i32
    %c0_i32_1 = arith.constant 0 : i32
    return %c0_i32, %c0_i32_0 : i32, i32
  }
  func.func @transform_7(%arg0: i32) -> (i32, i32) {
    %c0_i32 = arith.constant 0 : i32
    %c0_i32_0 = arith.constant 0 : i32
    %c0_i32_1 = arith.constant 0 : i32
    return %c0_i32, %c0_i32_0 : i32, i32
  }
  func.func @transform_8(%arg0: i32) -> (i32, i32) {
    %c0_i32 = arith.constant 0 : i32
    %c0_i32_0 = arith.constant 0 : i32
    %c0_i32_1 = arith.constant 0 : i32
    return %c0_i32, %c0_i32_0 : i32, i32
  }
  func.func @transform_9(%arg0: i32) -> (i32, i32) {
    %c0_i32 = arith.constant 0 : i32
    %c0_i32_0 = arith.constant 0 : i32
    %c0_i32_1 = arith.constant 0 : i32
    return %c0_i32, %c0_i32_0 : i32, i32
  }
  func.func @transform_10(%arg0: i32) -> (i32, i32) {
    %c0_i32 = arith.constant 0 : i32
    %c0_i32_0 = arith.constant 0 : i32
    %c0_i32_1 = arith.constant 0 : i32
    return %c0_i32, %c0_i32_0 : i32, i32
  }
  func.func @transform_11(%arg0: i32) -> (i32, i32) {
    %c0_i32 = arith.constant 0 : i32
    %c0_i32_0 = arith.constant 0 : i32
    %c0_i32_1 = arith.constant 0 : i32
    return %c0_i32, %c0_i32_0 : i32, i32
  }
  func.func @transform_12(%arg0: i32) -> (i32, i32) {
    %c0_i32 = arith.constant 0 : i32
    %c0_i32_0 = arith.constant 0 : i32
    %c0_i32_1 = arith.constant 0 : i32
    return %c0_i32, %c0_i32_0 : i32, i32
  }
  func.func @transform_13(%arg0: i32) -> (i32, i32) {
    %c0_i32 = arith.constant 0 : i32
    %c0_i32_0 = arith.constant 0 : i32
    %c0_i32_1 = arith.constant 0 : i32
    return %c0_i32, %c0_i32_0 : i32, i32
  }
  func.func @transform_14(%arg0: i32) -> i32 {
    %c0_i32 = arith.constant 0 : i32
    %c0_i32_0 = arith.constant 0 : i32
    return %c0_i32 : i32
  }
  func.func @transform_15(%arg0: i32) -> (i32, i32) {
    %c0_i32 = arith.constant 0 : i32
    %c0_i32_0 = arith.constant 0 : i32
    %c0_i32_1 = arith.constant 0 : i32
    return %c0_i32, %c0_i32_0 : i32, i32
  }
  func.func @transform_16(%arg0: i32) -> (i32, i32) {
    %c0_i32 = arith.constant 0 : i32
    %c0_i32_0 = arith.constant 0 : i32
    %c0_i32_1 = arith.constant 0 : i32
    return %c0_i32, %c0_i32_0 : i32, i32
  }
}

</mosaic_0001>

<llo_original>
// kernel: tpu_custom_call.1
$region0: #{tpu_custom_call.1}
  #allocation0 [shape = 'u32[]', space=smem, size = 0x4, offset = 0x4, fixed_abs, tag = 'smem constant byte address 0x4 - core index']
  #allocation1 [shape = 'u32[72,128]{1,0:T(1,128)}', space=vmem, size = 0x9000, scoped, tag = 'internal scratch']
  %s0 = inlined_call_operand.hbm [shape: bf16[8,128], index: 0, kind: input, shape index: {}]
  %s1 = inlined_call_operand.hbm [shape: f32[8,128], index: 1, kind: input, shape index: {}]
  %s2 = inlined_call_operand.hbm [shape: bf16[128,128], index: 2, kind: input, shape index: {}]
  %s3 = inlined_call_operand.vmem [shape: f32[1,128], index: 3, kind: input, shape index: {}]
  %s4 = inlined_call_operand.hbm [shape: bf16[128,128], index: 4, kind: input, shape index: {}]
  %s5 = inlined_call_operand.vmem [shape: f32[1,128], index: 5, kind: input, shape index: {}]
  %s6 = inlined_call_operand.hbm [shape: bf16[128,128], index: 6, kind: input, shape index: {}]
  %s7 = inlined_call_operand.vmem [shape: f32[1,128], index: 7, kind: input, shape index: {}]
  %s8 = inlined_call_operand.hbm [shape: bf16[128,128], index: 8, kind: input, shape index: {}]
  %s9 = inlined_call_operand.vmem [shape: f32[1,128], index: 9, kind: input, shape index: {}]
  %s10 = inlined_call_operand.hbm [shape: bf16[128,128], index: 10, kind: input, shape index: {}]
  %s11 = inlined_call_operand.vmem [shape: f32[1,128], index: 11, kind: input, shape index: {}]
  %s12 = inlined_call_operand.hbm [shape: f32[8,128], index: 12, kind: output, shape index: {0}]
  %s13 = inlined_call_operand.hbm [shape: f32[8,128], index: 13, kind: output, shape index: {1}]
  %s14 = inlined_call_operand.hbm [shape: f32[1], index: 14, kind: output, shape index: {2}]
  %s15 = inlined_call_operand.hbm [shape: f32[8,128], index: 15, kind: output, shape index: {3}]
  %s16 = inlined_call_operand.hbm [shape: bf16[8,128], index: 16, kind: output, shape index: {4}]
  %17 = xla_tuple %s12, %s13, %s14, %s15, %s16
  %s18 = sld [smem:[#allocation0]]
  $region118: #{tpu_custom_call.1} parent=0
    _
  %s20 = ssub.s32 1, %s18
  %s21 = scalar_select 0, %s20, %s18
  $region1: #{tpu_custom_call.1} parent=0
    #allocation2 [shape = 'u8[2048]{0}', space=vmem, size = 0x800, scoped, tag = 'input window, operand 0, single buffered']
    #allocation3 [shape = 's32[1]{0}', space=sflag, size = 0x4, scoped, tag = 'scoped memory for tpu_custom_call.1']
    #allocation4 [shape = 's32[1]{0}', space=sflag, size = 0x4, scoped, tag = 'scoped memory for tpu_custom_call.1']
    #allocation5 [shape = 's32[1]{0}', space=sflag, size = 0x4, scoped, tag = 'scoped memory for tpu_custom_call.1']
    #allocation6 [shape = 'u8[4096]{0}', space=vmem, size = 0x1000, scoped, tag = 'input window, operand 1, single buffered']
    #allocation7 [shape = 's32[1]{0}', space=sflag, size = 0x4, scoped, tag = 'scoped memory for tpu_custom_call.1']
    #allocation8 [shape = 'u8[32768]{0}', space=vmem, size = 0x8000, scoped, tag = 'input window, operand 2, single buffered']
    #allocation9 [shape = 'u8[32768]{0}', space=vmem, size = 0x8000, scoped, tag = 'input window, operand 4, single buffered']
    #allocation10 [shape = 's32[1]{0}', space=sflag, size = 0x4, scoped, tag = 'scoped memory for tpu_custom_call.1']
    #allocation11 [shape = 'u8[32768]{0}', space=vmem, size = 0x8000, scoped, tag = 'input window, operand 6, single buffered']
    #allocation12 [shape = 'u8[32768]{0}', space=vmem, size = 0x8000, scoped, tag = 'input window, operand 8, single buffered']
    #allocation13 [shape = 's32[1]{0}', space=sflag, size = 0x4, scoped, tag = 'scoped memory for tpu_custom_call.1']
    #allocation14 [shape = 'u8[32768]{0}', space=vmem, size = 0x8000, scoped, tag = 'input window, operand 10, single buffered']
    #allocation15 [shape = 'u8[4096]{0}', space=vmem, size = 0x1000, scoped, tag = 'output window, operand 0, single buffered']
    #allocation16 [shape = 'u8[4096]{0}', space=vmem, size = 0x1000, scoped, tag = 'output window, operand 1, single buffered']
    #allocation17 [shape = 's32[1]{0}', space=sflag, size = 0x4, scoped, tag = 'scoped memory for tpu_custom_call.1']
    #allocation18 [shape = 'u8[512]{0}', space=smem, size = 0x200, scoped, tag = 'output window, operand 2, single buffered']
    #allocation19 [shape = 'u8[4096]{0}', space=vmem, size = 0x1000, scoped, tag = 'output window, operand 3, single buffered']
    #allocation20 [shape = 'u8[2048]{0}', space=vmem, size = 0x800, scoped, tag = 'output window, operand 4, single buffered']
    #allocation21 [shape = 's32[1]{0}', space=sflag, size = 0x4, scoped, tag = 'scoped memory for tpu_custom_call.1']
    %22 = vsyncpa [#allocation3], 0
    %23 = vsyncpa [#allocation7], 0
    %24 = vsyncpa [#allocation10], 0
    %25 = vsyncpa [#allocation13], 0
    %26 = vsyncpa [#allocation4], 0
    %27 = vsyncpa [#allocation17], 0
    %28 = vsyncpa [#allocation5], 0
    %29 = vsyncpa [#allocation21], 0
    // Predicated region
    $region2: #{tpu_custom_call.1} parent=1 // pred_check
      _
    $region3: #{tpu_custom_call.1} parent=1 // pred_check_branch
      %31 = sbr.rel (0) target = $region5
    $region4: #{tpu_custom_call.1} parent=1 // pred_region
      %33 = vsyncadd [#allocation3], 0
      %s35 = sshll.u32 %s0, 4
      %s36 = int_to_ptr.hbm [resolvable:$true] %s35
      %s37 = sshll.u32 [#allocation2], 4
      %s38 = int_to_ptr.vmem [resolvable:$true] %s37
      %40 = dma.hbm_to_vmem [thread:$0]  %s36, 64, %s38, [#allocation3]
    $region5: #{tpu_custom_call.1} parent=1 // pred_fallthru
      _
    // Predicated region
    $region6: #{tpu_custom_call.1} parent=1 // pred_check
      _
    $region7: #{tpu_custom_call.1} parent=1 // pred_check_branch
      %42 = sbr.rel (0) target = $region9
    $region8: #{tpu_custom_call.1} parent=1 // pred_region
      %44 = vsyncadd [#allocation7], 0
      %s46 = sshll.u32 %s1, 4
      %s47 = int_to_ptr.hbm [resolvable:$true] %s46
      %s48 = sshll.u32 [#allocation6], 4
      %s49 = int_to_ptr.vmem [resolvable:$true] %s48
      %51 = dma.hbm_to_vmem [thread:$0]  %s47, 128, %s49, [#allocation7]
    $region9: #{tpu_custom_call.1} parent=1 // pred_fallthru
      _
    // Predicated region
    $region10: #{tpu_custom_call.1} parent=1 // pred_check
      _
    $region11: #{tpu_custom_call.1} parent=1 // pred_check_branch
      %53 = sbr.rel (0) target = $region13
    $region12: #{tpu_custom_call.1} parent=1 // pred_region
      %55 = vsyncadd [#allocation7], 0
      %s56 = sshll.u32 %s2, 4
      %s57 = int_to_ptr.hbm [resolvable:$true] %s56
      %s58 = sshll.u32 [#allocation8], 4
      %s59 = int_to_ptr.vmem [resolvable:$true] %s58
      %64 = dma.hbm_to_vmem [thread:$0]  %s57, 1024, %s59, [#allocation7], 64, 64, 4
    $region13: #{tpu_custom_call.1} parent=1 // pred_fallthru
      _
    // Predicated region
    $region14: #{tpu_custom_call.1} parent=1 // pred_check
      _
    $region15: #{tpu_custom_call.1} parent=1 // pred_check_branch
      %66 = sbr.rel (0) target = $region17
    $region16: #{tpu_custom_call.1} parent=1 // pred_region
      _
    $region17: #{tpu_custom_call.1} parent=1 // pred_fallthru
      _
    // Predicated region
    $region18: #{tpu_custom_call.1} parent=1 // pred_check
      _
    $region19: #{tpu_custom_call.1} parent=1 // pred_check_branch
      %68 = sbr.rel (0) target = $region21
    $region20: #{tpu_custom_call.1} parent=1 // pred_region
      %70 = vsyncadd [#allocation10], 0
      %s71 = sshll.u32 %s4, 4
      %s72 = int_to_ptr.hbm [resolvable:$true] %s71
      %s73 = sshll.u32 [#allocation9], 4
      %s74 = int_to_ptr.vmem [resolvable:$true] %s73
      %79 = dma.hbm_to_vmem [thread:$0]  %s72, 1024, %s74, [#allocation10], 64, 64, 4
    $region21: #{tpu_custom_call.1} parent=1 // pred_fallthru
      _
    // Predicated region
    $region22: #{tpu_custom_call.1} parent=1 // pred_check
      _
    $region23: #{tpu_custom_call.1} parent=1 // pred_check_branch
      %81 = sbr.rel (0) target = $region25
    $region24: #{tpu_custom_call.1} parent=1 // pred_region
      _
    $region25: #{tpu_custom_call.1} parent=1 // pred_fallthru
      _
    // Predicated region
    $region26: #{tpu_custom_call.1} parent=1 // pred_check
      _
    $region27: #{tpu_custom_call.1} parent=1 // pred_check_branch
      %83 = sbr.rel (0) target = $region29
    $region28: #{tpu_custom_call.1} parent=1 // pred_region
      %85 = vsyncadd [#allocation10], 0
      %s86 = sshll.u32 %s6, 4
      %s87 = int_to_ptr.hbm [resolvable:$true] %s86
      %s88 = sshll.u32 [#allocation11], 4
      %s89 = int_to_ptr.vmem [resolvable:$true] %s88
      %94 = dma.hbm_to_vmem [thread:$0]  %s87, 1024, %s89, [#allocation10], 64, 64, 4
    $region29: #{tpu_custom_call.1} parent=1 // pred_fallthru
      _
    // Predicated region
    $region30: #{tpu_custom_call.1} parent=1 // pred_check
      _
    $region31: #{tpu_custom_call.1} parent=1 // pred_check_branch
      %96 = sbr.rel (0) target = $region33
    $region32: #{tpu_custom_call.1} parent=1 // pred_region
      _
    $region33: #{tpu_custom_call.1} parent=1 // pred_fallthru
      _
    // Predicated region
    $region34: #{tpu_custom_call.1} parent=1 // pred_check
      _
    $region35: #{tpu_custom_call.1} parent=1 // pred_check_branch
      %98 = sbr.rel (0) target = $region37
    $region36: #{tpu_custom_call.1} parent=1 // pred_region
      %100 = vsyncadd [#allocation13], 0
      %s101 = sshll.u32 %s8, 4
      %s102 = int_to_ptr.hbm [resolvable:$true] %s101
      %s103 = sshll.u32 [#allocation12], 4
      %s104 = int_to_ptr.vmem [resolvable:$true] %s103
      %109 = dma.hbm_to_vmem [thread:$0]  %s102, 1024, %s104, [#allocation13], 64, 64, 4
    $region37: #{tpu_custom_call.1} parent=1 // pred_fallthru
      _
    // Predicated region
    $region38: #{tpu_custom_call.1} parent=1 // pred_check
      _
    $region39: #{tpu_custom_call.1} parent=1 // pred_check_branch
      %111 = sbr.rel (0) target = $region41
    $region40: #{tpu_custom_call.1} parent=1 // pred_region
      _
    $region41: #{tpu_custom_call.1} parent=1 // pred_fallthru
      _
    // Predicated region
    $region42: #{tpu_custom_call.1} parent=1 // pred_check
      _
    $region43: #{tpu_custom_call.1} parent=1 // pred_check_branch
      %113 = sbr.rel (0) target = $region45
    $region44: #{tpu_custom_call.1} parent=1 // pred_region
      %115 = vsyncadd [#allocation13], 0
      %s116 = sshll.u32 %s10, 4
      %s117 = int_to_ptr.hbm [resolvable:$true] %s116
      %s118 = sshll.u32 [#allocation14], 4
      %s119 = int_to_ptr.vmem [resolvable:$true] %s118
      %124 = dma.hbm_to_vmem [thread:$0]  %s117, 1024, %s119, [#allocation13], 64, 64, 4
    $region45: #{tpu_custom_call.1} parent=1 // pred_fallthru
      _
    // Predicated region
    $region46: #{tpu_custom_call.1} parent=1 // pred_check
      _
    $region47: #{tpu_custom_call.1} parent=1 // pred_check_branch
      %126 = sbr.rel (0) target = $region49
    $region48: #{tpu_custom_call.1} parent=1 // pred_region
      _
    $region49: #{tpu_custom_call.1} parent=1 // pred_fallthru
      _
    // Predicated region
    $region50: #{tpu_custom_call.1} parent=1 // pred_check
      _
    $region51: #{tpu_custom_call.1} parent=1 // pred_check_branch
      %128 = sbr.rel (0) target = $region53
    $region52: #{tpu_custom_call.1} parent=1 // pred_region
      %130 = dma.done [#allocation3], 64
    $region53: #{tpu_custom_call.1} parent=1 // pred_fallthru
      _
    // Predicated region
    $region54: #{tpu_custom_call.1} parent=1 // pred_check
      _
    $region55: #{tpu_custom_call.1} parent=1 // pred_check_branch
      %132 = sbr.rel (0) target = $region57
    $region56: #{tpu_custom_call.1} parent=1 // pred_region
      %134 = dma.done [#allocation7], 128
    $region57: #{tpu_custom_call.1} parent=1 // pred_fallthru
      _
    // Predicated region
    $region58: #{tpu_custom_call.1} parent=1 // pred_check
      _
    $region59: #{tpu_custom_call.1} parent=1 // pred_check_branch
      %136 = sbr.rel (0) target = $region61
    $region60: #{tpu_custom_call.1} parent=1 // pred_region
      %138 = dma.done [#allocation7], 1024
    $region61: #{tpu_custom_call.1} parent=1 // pred_fallthru
      _
    // Predicated region
    $region62: #{tpu_custom_call.1} parent=1 // pred_check
      _
    $region63: #{tpu_custom_call.1} parent=1 // pred_check_branch
      %140 = sbr.rel (0) target = $region65
    $region64: #{tpu_custom_call.1} parent=1 // pred_region
      %142 = dma.done [#allocation10], 1024
    $region65: #{tpu_custom_call.1} parent=1 // pred_fallthru
      _
    // Predicated region
    $region66: #{tpu_custom_call.1} parent=1 // pred_check
      _
    $region67: #{tpu_custom_call.1} parent=1 // pred_check_branch
      %144 = sbr.rel (0) target = $region69
    $region68: #{tpu_custom_call.1} parent=1 // pred_region
      %146 = dma.done [#allocation10], 1024
    $region69: #{tpu_custom_call.1} parent=1 // pred_fallthru
      _
    // Predicated region
    $region70: #{tpu_custom_call.1} parent=1 // pred_check
      _
    $region71: #{tpu_custom_call.1} parent=1 // pred_check_branch
      %148 = sbr.rel (0) target = $region73
    $region72: #{tpu_custom_call.1} parent=1 // pred_region
      %150 = dma.done [#allocation13], 1024
    $region73: #{tpu_custom_call.1} parent=1 // pred_fallthru
      _
    // Predicated region
    $region74: #{tpu_custom_call.1} parent=1 // pred_check
      _
    $region75: #{tpu_custom_call.1} parent=1 // pred_check_branch
      %152 = sbr.rel (0) target = $region77
    $region76: #{tpu_custom_call.1} parent=1 // pred_region
      %154 = dma.done [#allocation13], 1024
    $region77: #{tpu_custom_call.1} parent=1 // pred_fallthru
      _
    %v155 = vld [vmem:[#allocation2] sm:$0xf]
    %v156 = vld [vmem:[#allocation8] sm:$0xf]
    %v157 = vld [vmem:[#allocation8 + $0x4] sm:$0xf]
    %v158 = vld [vmem:[#allocation8 + $0x8] sm:$0xf]
    %v159 = vld [vmem:[#allocation8 + $0xc] sm:$0xf]
    %v160 = vld [vmem:[#allocation8 + $0x10] sm:$0xf]
    %v161 = vld [vmem:[#allocation8 + $0x14] sm:$0xf]
    %v162 = vld [vmem:[#allocation8 + $0x18] sm:$0xf]
    %v163 = vld [vmem:[#allocation8 + $0x1c] sm:$0xf]
    %v164 = vld [vmem:[#allocation8 + $0x20] sm:$0xf]
    %v165 = vld [vmem:[#allocation8 + $0x24] sm:$0xf]
    %v166 = vld [vmem:[#allocation8 + $0x28] sm:$0xf]
    %v167 = vld [vmem:[#allocation8 + $0x2c] sm:$0xf]
    %v168 = vld [vmem:[#allocation8 + $0x30] sm:$0xf]
    %v169 = vld [vmem:[#allocation8 + $0x34] sm:$0xf]
    %v170 = vld [vmem:[#allocation8 + $0x38] sm:$0xf]
    %v171 = vld [vmem:[#allocation8 + $0x3c] sm:$0xf]
    %v172 = vld [vmem:[%s3] sm:$0x1]
    %v174 = vperm.slane %v172, 0
    %v192 = vunpack.c.l.b16 %v156
    %v193 = vunpack.c.l.b16 %v157
    %v194 = vunpack.c.l.b16 %v158
    %v195 = vunpack.c.l.b16 %v159
    %v196 = vunpack.c.l.b16 %v160
    %v197 = vunpack.c.l.b16 %v161
    %v198 = vunpack.c.l.b16 %v162
    %v199 = vunpack.c.l.b16 %v163
    %v200 = vunpack.c.l.b16 %v164
    %v201 = vunpack.c.l.b16 %v165
    %v202 = vunpack.c.l.b16 %v166
    %v203 = vunpack.c.l.b16 %v167
    %v204 = vunpack.c.l.b16 %v168
    %v205 = vunpack.c.l.b16 %v169
    %v206 = vunpack.c.l.b16 %v170
    %v207 = vunpack.c.l.b16 %v171
    %v208 = vpack.c.b16 %v193, %v192
    %v209 = vpack.c.b16 %v195, %v194
    %v210 = vpack.c.b16 %v197, %v196
    %v211 = vpack.c.b16 %v199, %v198
    %v212 = vpack.c.b16 %v201, %v200
    %v213 = vpack.c.b16 %v203, %v202
    %v214 = vpack.c.b16 %v205, %v204
    %v215 = vpack.c.b16 %v207, %v206
    %224 = vmatpush.bf16.msra.mxu0 %v215
    %225 = vmatpush.bf16.msra.mxu0 %v214
    %226 = vmatpush.bf16.msra.mxu0 %v213
    %227 = vmatpush.bf16.msra.mxu0 %v212
    %228 = vmatpush.bf16.msra.mxu0 %v211
    %229 = vmatpush.bf16.msra.mxu0 %v210
    %230 = vmatpush.bf16.msra.mxu0 %v209
    %231 = vmatpush.bf16.msra.mxu0 %v208
    %232 = vmatmul.bf16.gmra.mxu0 %v155
    %v233 = vpop.f32.mrf.mxu0
    %v234 = vadd.f32 %v174, %v233
    %v235 = vpop.f32.mrf.mxu0
    %236 = vdwg.mxu0
    %v237 = vmax.f32 %v234, 0.0
    %v238 = vpack.c.bf16 %v237, %v237
    %v239 = vld [vmem:[#allocation9] sm:$0xf]
    %v240 = vld [vmem:[#allocation9 + $0x4] sm:$0xf]
    %v241 = vld [vmem:[#allocation9 + $0x8] sm:$0xf]
    %v242 = vld [vmem:[#allocation9 + $0xc] sm:$0xf]
    %v243 = vld [vmem:[#allocation9 + $0x10] sm:$0xf]
    %v244 = vld [vmem:[#allocation9 + $0x14] sm:$0xf]
    %v245 = vld [vmem:[#allocation9 + $0x18] sm:$0xf]
    %v246 = vld [vmem:[#allocation9 + $0x1c] sm:$0xf]
    %v247 = vld [vmem:[#allocation9 + $0x20] sm:$0xf]
    %v248 = vld [vmem:[#allocation9 + $0x24] sm:$0xf]
    %v249 = vld [vmem:[#allocation9 + $0x28] sm:$0xf]
    %v250 = vld [vmem:[#allocation9 + $0x2c] sm:$0xf]
    %v251 = vld [vmem:[#allocation9 + $0x30] sm:$0xf]
    %v252 = vld [vmem:[#allocation9 + $0x34] sm:$0xf]
    %v253 = vld [vmem:[#allocation9 + $0x38] sm:$0xf]
    %v254 = vld [vmem:[#allocation9 + $0x3c] sm:$0xf]
    %v255 = vld [vmem:[%s5] sm:$0x1]
    %v257 = vperm.slane %v255, 0
    %v275 = vunpack.c.l.b16 %v239
    %v276 = vunpack.c.l.b16 %v240
    %v277 = vunpack.c.l.b16 %v241
    %v278 = vunpack.c.l.b16 %v242
    %v279 = vunpack.c.l.b16 %v243
    %v280 = vunpack.c.l.b16 %v244
    %v281 = vunpack.c.l.b16 %v245
    %v282 = vunpack.c.l.b16 %v246
    %v283 = vunpack.c.l.b16 %v247
    %v284 = vunpack.c.l.b16 %v248
    %v285 = vunpack.c.l.b16 %v249
    %v286 = vunpack.c.l.b16 %v250
    %v287 = vunpack.c.l.b16 %v251
    %v288 = vunpack.c.l.b16 %v252
    %v289 = vunpack.c.l.b16 %v253
    %v290 = vunpack.c.l.b16 %v254
    %v291 = vpack.c.b16 %v276, %v275
    %v292 = vpack.c.b16 %v278, %v277
    %v293 = vpack.c.b16 %v280, %v279
    %v294 = vpack.c.b16 %v282, %v281
    %v295 = vpack.c.b16 %v284, %v283
    %v296 = vpack.c.b16 %v286, %v285
    %v297 = vpack.c.b16 %v288, %v287
    %v298 = vpack.c.b16 %v290, %v289
    %307 = vmatpush.bf16.msra.mxu0 %v298
    %308 = vmatpush.bf16.msra.mxu0 %v297
    %309 = vmatpush.bf16.msra.mxu0 %v296
    %310 = vmatpush.bf16.msra.mxu0 %v295
    %311 = vmatpush.bf16.msra.mxu0 %v294
    %312 = vmatpush.bf16.msra.mxu0 %v293
    %313 = vmatpush.bf16.msra.mxu0 %v292
    %314 = vmatpush.bf16.msra.mxu0 %v291
    %315 = vmatmul.bf16.gmra.mxu0 %v238
    %v316 = vpop.f32.mrf.mxu0
    %v317 = vadd.f32 %v257, %v316
    %v318 = vpop.f32.mrf.mxu0
    %319 = vdwg.mxu0
    %v320 = vmax.f32 %v317, 0.0
    %v321 = vpack.c.bf16 %v320, %v320
    %v322 = vld [vmem:[#allocation11] sm:$0xf]
    %v323 = vld [vmem:[#allocation11 + $0x4] sm:$0xf]
    %v324 = vld [vmem:[#allocation11 + $0x8] sm:$0xf]
    %v325 = vld [vmem:[#allocation11 + $0xc] sm:$0xf]
    %v326 = vld [vmem:[#allocation11 + $0x10] sm:$0xf]
    %v327 = vld [vmem:[#allocation11 + $0x14] sm:$0xf]
    %v328 = vld [vmem:[#allocation11 + $0x18] sm:$0xf]
    %v329 = vld [vmem:[#allocation11 + $0x1c] sm:$0xf]
    %v330 = vld [vmem:[#allocation11 + $0x20] sm:$0xf]
    %v331 = vld [vmem:[#allocation11 + $0x24] sm:$0xf]
    %v332 = vld [vmem:[#allocation11 + $0x28] sm:$0xf]
    %v333 = vld [vmem:[#allocation11 + $0x2c] sm:$0xf]
    %v334 = vld [vmem:[#allocation11 + $0x30] sm:$0xf]
    %v335 = vld [vmem:[#allocation11 + $0x34] sm:$0xf]
    %v336 = vld [vmem:[#allocation11 + $0x38] sm:$0xf]
    %v337 = vld [vmem:[#allocation11 + $0x3c] sm:$0xf]
    %v338 = vld [vmem:[%s7] sm:$0x1]
    %v340 = vperm.slane %v338, 0
    %v358 = vunpack.c.l.b16 %v322
    %v359 = vunpack.c.l.b16 %v323
    %v360 = vunpack.c.l.b16 %v324
    %v361 = vunpack.c.l.b16 %v325
    %v362 = vunpack.c.l.b16 %v326
    %v363 = vunpack.c.l.b16 %v327
    %v364 = vunpack.c.l.b16 %v328
    %v365 = vunpack.c.l.b16 %v329
    %v366 = vunpack.c.l.b16 %v330
    %v367 = vunpack.c.l.b16 %v331
    %v368 = vunpack.c.l.b16 %v332
    %v369 = vunpack.c.l.b16 %v333
    %v370 = vunpack.c.l.b16 %v334
    %v371 = vunpack.c.l.b16 %v335
    %v372 = vunpack.c.l.b16 %v336
    %v373 = vunpack.c.l.b16 %v337
    %v374 = vpack.c.b16 %v359, %v358
    %v375 = vpack.c.b16 %v361, %v360
    %v376 = vpack.c.b16 %v363, %v362
    %v377 = vpack.c.b16 %v365, %v364
    %v378 = vpack.c.b16 %v367, %v366
    %v379 = vpack.c.b16 %v369, %v368
    %v380 = vpack.c.b16 %v371, %v370
    %v381 = vpack.c.b16 %v373, %v372
    %390 = vmatpush.bf16.msra.mxu0 %v381
    %391 = vmatpush.bf16.msra.mxu0 %v380
    %392 = vmatpush.bf16.msra.mxu0 %v379
    %393 = vmatpush.bf16.msra.mxu0 %v378
    %394 = vmatpush.bf16.msra.mxu0 %v377
    %395 = vmatpush.bf16.msra.mxu0 %v376
    %396 = vmatpush.bf16.msra.mxu0 %v375
    %397 = vmatpush.bf16.msra.mxu0 %v374
    %398 = vmatmul.bf16.gmra.mxu0 %v321
    %v399 = vpop.f32.mrf.mxu0
    %v400 = vadd.f32 %v340, %v399
    %v401 = vpop.f32.mrf.mxu0
    %402 = vdwg.mxu0
    %v403 = vld [vmem:[#allocation12] sm:$0xf]
    %v404 = vld [vmem:[#allocation12 + $0x4] sm:$0xf]
    %v405 = vld [vmem:[#allocation12 + $0x8] sm:$0xf]
    %v406 = vld [vmem:[#allocation12 + $0xc] sm:$0xf]
    %v407 = vld [vmem:[#allocation12 + $0x10] sm:$0xf]
    %v408 = vld [vmem:[#allocation12 + $0x14] sm:$0xf]
    %v409 = vld [vmem:[#allocation12 + $0x18] sm:$0xf]
    %v410 = vld [vmem:[#allocation12 + $0x1c] sm:$0xf]
    %v411 = vld [vmem:[#allocation12 + $0x20] sm:$0xf]
    %v412 = vld [vmem:[#allocation12 + $0x24] sm:$0xf]
    %v413 = vld [vmem:[#allocation12 + $0x28] sm:$0xf]
    %v414 = vld [vmem:[#allocation12 + $0x2c] sm:$0xf]
    %v415 = vld [vmem:[#allocation12 + $0x30] sm:$0xf]
    %v416 = vld [vmem:[#allocation12 + $0x34] sm:$0xf]
    %v417 = vld [vmem:[#allocation12 + $0x38] sm:$0xf]
    %v418 = vld [vmem:[#allocation12 + $0x3c] sm:$0xf]
    %v419 = vld [vmem:[%s9] sm:$0x1]
    %v421 = vperm.slane %v419, 0
    %v439 = vunpack.c.l.b16 %v403
    %v440 = vunpack.c.l.b16 %v404
    %v441 = vunpack.c.l.b16 %v405
    %v442 = vunpack.c.l.b16 %v406
    %v443 = vunpack.c.l.b16 %v407
    %v444 = vunpack.c.l.b16 %v408
    %v445 = vunpack.c.l.b16 %v409
    %v446 = vunpack.c.l.b16 %v410
    %v447 = vunpack.c.l.b16 %v411
    %v448 = vunpack.c.l.b16 %v412
    %v449 = vunpack.c.l.b16 %v413
    %v450 = vunpack.c.l.b16 %v414
    %v451 = vunpack.c.l.b16 %v415
    %v452 = vunpack.c.l.b16 %v416
    %v453 = vunpack.c.l.b16 %v417
    %v454 = vunpack.c.l.b16 %v418
    %v455 = vpack.c.b16 %v440, %v439
    %v456 = vpack.c.b16 %v442, %v441
    %v457 = vpack.c.b16 %v444, %v443
    %v458 = vpack.c.b16 %v446, %v445
    %v459 = vpack.c.b16 %v448, %v447
    %v460 = vpack.c.b16 %v450, %v449
    %v461 = vpack.c.b16 %v452, %v451
    %v462 = vpack.c.b16 %v454, %v453
    %471 = vmatpush.bf16.msra.mxu0 %v462
    %472 = vmatpush.bf16.msra.mxu0 %v461
    %473 = vmatpush.bf16.msra.mxu0 %v460
    %474 = vmatpush.bf16.msra.mxu0 %v459
    %475 = vmatpush.bf16.msra.mxu0 %v458
    %476 = vmatpush.bf16.msra.mxu0 %v457
    %477 = vmatpush.bf16.msra.mxu0 %v456
    %478 = vmatpush.bf16.msra.mxu0 %v455
    %479 = vmatmul.bf16.gmra.mxu0 %v321
    %v480 = vpop.f32.mrf.mxu0
    %v481 = vadd.f32 %v421, %v480
    %v482 = vpop.f32.mrf.mxu0
    %483 = vdwg.mxu0
    %484 = vst [vmem:[#allocation15] sm:$0xff] %v400
    %485 = vst [vmem:[#allocation16] sm:$0xff] %v481
    %v486 = vmul.f32 %v481, 1.442695
    %v487 = vpow.pop %v486
    %v488 = vmul.f32 %v400, %v400
    %v489 = vadd.f32 %v487, %v488
    %v490 = vsub.f32 %v489, 1.0
    %v491 = vsub.f32 %v490, %v481
    %492 = vadd.xlane.f32.xlu0 %v491
    %v493 = vpop.xlane.xlu0 %492
    %v494 = vmul.f32 %v493, 0.5
    %v495 = vmul.f32 %v494, 0.125
    %v496 = vlaneseq
    %v497 = vshrl.u32 %v496, 7
    %vm498 = vcmp.lt.s32.totalorder %v497, 2
    %v499 = vsel %vm498, %v495, 0.0
    %vm500 = vcmask 7168
    %v501 = vsel %vm500, %v499, 0.0
    %502 = vadd.xlane.f32.xlu0 %v501
    %v503 = vpop.xlane.xlu0 %502
    %v504 = vrot.slane %v503, 4
    %v505 = vadd.f32 %v503, %v504
    %v506 = vrot.slane %v505, 2
    %v507 = vadd.f32 %v505, %v506
    %v508 = vrot.slane %v507, 1
    %v509 = vadd.f32 %v507, %v508
    %s510 = vtos %v509
    %s511 = smul.f32 %s510, 0.5
    %s512 = scalar_lea.smem [#allocation18], 0
    %513 = sst [smem:[%s512]] %s511
    %v514 = vld [vmem:[#allocation6] sm:$0xff]
    %v515 = vmul.f32 %v481, 0.5
    %v516 = vmul.f32 %v515, 1.442695
    %v517 = vpow.pop %v516
    %v518 = vmul.f32 %v514, %v517
    %v519 = vadd.f32 %v400, %v518
    %520 = vst [vmem:[#allocation19] sm:$0xff] %v519
    %v521 = vpack.c.bf16 %v519, %v519
    %v522 = vld [vmem:[#allocation14] sm:$0xf]
    %v523 = vld [vmem:[#allocation14 + $0x4] sm:$0xf]
    %v524 = vld [vmem:[#allocation14 + $0x8] sm:$0xf]
    %v525 = vld [vmem:[#allocation14 + $0xc] sm:$0xf]
    %v526 = vld [vmem:[#allocation14 + $0x10] sm:$0xf]
    %v527 = vld [vmem:[#allocation14 + $0x14] sm:$0xf]
    %v528 = vld [vmem:[#allocation14 + $0x18] sm:$0xf]
    %v529 = vld [vmem:[#allocation14 + $0x1c] sm:$0xf]
    %v530 = vld [vmem:[#allocation14 + $0x20] sm:$0xf]
    %v531 = vld [vmem:[#allocation14 + $0x24] sm:$0xf]
    %v532 = vld [vmem:[#allocation14 + $0x28] sm:$0xf]
    %v533 = vld [vmem:[#allocation14 + $0x2c] sm:$0xf]
    %v534 = vld [vmem:[#allocation14 + $0x30] sm:$0xf]
    %v535 = vld [vmem:[#allocation14 + $0x34] sm:$0xf]
    %v536 = vld [vmem:[#allocation14 + $0x38] sm:$0xf]
    %v537 = vld [vmem:[#allocation14 + $0x3c] sm:$0xf]
    %v538 = vld [vmem:[%s11] sm:$0x1]
    %v540 = vperm.slane %v538, 0
    %v558 = vunpack.c.l.b16 %v522
    %v559 = vunpack.c.l.b16 %v523
    %v560 = vunpack.c.l.b16 %v524
    %v561 = vunpack.c.l.b16 %v525
    %v562 = vunpack.c.l.b16 %v526
    %v563 = vunpack.c.l.b16 %v527
    %v564 = vunpack.c.l.b16 %v528
    %v565 = vunpack.c.l.b16 %v529
    %v566 = vunpack.c.l.b16 %v530
    %v567 = vunpack.c.l.b16 %v531
    %v568 = vunpack.c.l.b16 %v532
    %v569 = vunpack.c.l.b16 %v533
    %v570 = vunpack.c.l.b16 %v534
    %v571 = vunpack.c.l.b16 %v535
    %v572 = vunpack.c.l.b16 %v536
    %v573 = vunpack.c.l.b16 %v537
    %v574 = vpack.c.b16 %v559, %v558
    %v575 = vpack.c.b16 %v561, %v560
    %v576 = vpack.c.b16 %v563, %v562
    %v577 = vpack.c.b16 %v565, %v564
    %v578 = vpack.c.b16 %v567, %v566
    %v579 = vpack.c.b16 %v569, %v568
    %v580 = vpack.c.b16 %v571, %v570
    %v581 = vpack.c.b16 %v573, %v572
    %590 = vmatpush.bf16.msra.mxu0 %v581
    %591 = vmatpush.bf16.msra.mxu0 %v580
    %592 = vmatpush.bf16.msra.mxu0 %v579
    %593 = vmatpush.bf16.msra.mxu0 %v578
    %594 = vmatpush.bf16.msra.mxu0 %v577
    %595 = vmatpush.bf16.msra.mxu0 %v576
    %596 = vmatpush.bf16.msra.mxu0 %v575
    %597 = vmatpush.bf16.msra.mxu0 %v574
    %598 = vmatmul.bf16.gmra.mxu0 %v521
    %v599 = vpop.f32.mrf.mxu0
    %v600 = vadd.f32 %v540, %v599
    %v601 = vpop.f32.mrf.mxu0
    %602 = vdwg.mxu0
    %v603 = vmax.f32 %v600, 0.0
    %v604 = vpack.c.bf16 %v603, %v603
    %605 = vst [vmem:[#allocation20] sm:$0xf] %v604
    // Predicated region
    $region78: #{tpu_custom_call.1} parent=1 // pred_check
      _
    $region79: #{tpu_custom_call.1} parent=1 // pred_check_branch
      %607 = sbr.rel (0) target = $region81
    $region80: #{tpu_custom_call.1} parent=1 // pred_region
      %609 = vsyncadd [#allocation4], 0
      %s611 = sshll.u32 [#allocation15], 4
      %s612 = int_to_ptr.vmem [resolvable:$true] %s611
      %s613 = sshll.u32 %s12, 4
      %s614 = int_to_ptr.hbm [resolvable:$true] %s613
      %616 = dma.vmem_to_hbm [thread:$0]  %s612, 128, %s614, [#allocation4]
    $region81: #{tpu_custom_call.1} parent=1 // pred_fallthru
      _
    // Predicated region
    $region82: #{tpu_custom_call.1} parent=1 // pred_check
      _
    $region83: #{tpu_custom_call.1} parent=1 // pred_check_branch
      %618 = sbr.rel (0) target = $region85
    $region84: #{tpu_custom_call.1} parent=1 // pred_region
      %620 = vsyncadd [#allocation17], 0
      %s622 = sshll.u32 [#allocation16], 4
      %s623 = int_to_ptr.vmem [resolvable:$true] %s622
      %s624 = sshll.u32 %s13, 4
      %s625 = int_to_ptr.hbm [resolvable:$true] %s624
      %627 = dma.vmem_to_hbm [thread:$0]  %s623, 128, %s625, [#allocation17]
    $region85: #{tpu_custom_call.1} parent=1 // pred_fallthru
      _
    // Predicated region
    $region86: #{tpu_custom_call.1} parent=1 // pred_check
      _
    $region87: #{tpu_custom_call.1} parent=1 // pred_check_branch
      %629 = sbr.rel (0) target = $region89
    $region88: #{tpu_custom_call.1} parent=1 // pred_region
      %631 = vsyncadd [#allocation5], 0
      %s633 = sshll.u32 %s14, 4
      %s634 = int_to_ptr.hbm [resolvable:$true] %s633
      %636 = dma.smem_to_hbm [#allocation18], 16, %s634, [#allocation5]
    $region89: #{tpu_custom_call.1} parent=1 // pred_fallthru
      _
    // Predicated region
    $region90: #{tpu_custom_call.1} parent=1 // pred_check
      _
    $region91: #{tpu_custom_call.1} parent=1 // pred_check_branch
      %638 = sbr.rel (0) target = $region93
    $region92: #{tpu_custom_call.1} parent=1 // pred_region
      %640 = vsyncadd [#allocation17], 0
      %s642 = sshll.u32 [#allocation19], 4
      %s643 = int_to_ptr.vmem [resolvable:$true] %s642
      %s644 = sshll.u32 %s15, 4
      %s645 = int_to_ptr.hbm [resolvable:$true] %s644
      %647 = dma.vmem_to_hbm [thread:$0]  %s643, 128, %s645, [#allocation17]
    $region93: #{tpu_custom_call.1} parent=1 // pred_fallthru
      _
    // Predicated region
    $region94: #{tpu_custom_call.1} parent=1 // pred_check
      _
    $region95: #{tpu_custom_call.1} parent=1 // pred_check_branch
      %649 = sbr.rel (0) target = $region97
    $region96: #{tpu_custom_call.1} parent=1 // pred_region
      %651 = vsyncadd [#allocation21], 0
      %s653 = sshll.u32 [#allocation20], 4
      %s654 = int_to_ptr.vmem [resolvable:$true] %s653
      %s655 = sshll.u32 %s16, 4
      %s656 = int_to_ptr.hbm [resolvable:$true] %s655
      %658 = dma.vmem_to_hbm [thread:$0]  %s654, 64, %s656, [#allocation21]
    $region97: #{tpu_custom_call.1} parent=1 // pred_fallthru
      _
    // Predicated region
    $region98: #{tpu_custom_call.1} parent=1 // pred_check
      _
    $region99: #{tpu_custom_call.1} parent=1 // pred_check_branch
      %660 = sbr.rel (0) target = $region101
    $region100: #{tpu_custom_call.1} parent=1 // pred_region
      %662 = dma.done [#allocation4], 128
    $region101: #{tpu_custom_call.1} parent=1 // pred_fallthru
      _
    // Predicated region
    $region102: #{tpu_custom_call.1} parent=1 // pred_check
      _
    $region103: #{tpu_custom_call.1} parent=1 // pred_check_branch
      %664 = sbr.rel (0) target = $region105
    $region104: #{tpu_custom_call.1} parent=1 // pred_region
      %666 = dma.done [#allocation17], 128
    $region105: #{tpu_custom_call.1} parent=1 // pred_fallthru
      _
    // Predicated region
    $region106: #{tpu_custom_call.1} parent=1 // pred_check
      _
    $region107: #{tpu_custom_call.1} parent=1 // pred_check_branch
      %668 = sbr.rel (0) target = $region109
    $region108: #{tpu_custom_call.1} parent=1 // pred_region
      %670 = dma.done [#allocation5], 16
    $region109: #{tpu_custom_call.1} parent=1 // pred_fallthru
      _
    // Predicated region
    $region110: #{tpu_custom_call.1} parent=1 // pred_check
      _
    $region111: #{tpu_custom_call.1} parent=1 // pred_check_branch
      %672 = sbr.rel (0) target = $region113
    $region112: #{tpu_custom_call.1} parent=1 // pred_region
      %674 = dma.done [#allocation17], 128
    $region113: #{tpu_custom_call.1} parent=1 // pred_fallthru
      _
    // Predicated region
    $region114: #{tpu_custom_call.1} parent=1 // pred_check
      _
    $region115: #{tpu_custom_call.1} parent=1 // pred_check_branch
      %676 = sbr.rel (0) target = $region117
    $region116: #{tpu_custom_call.1} parent=1 // pred_region
      %678 = dma.done [#allocation21], 64
    $region117: #{tpu_custom_call.1} parent=1 // pred_fallthru
      _
    %679 = sfence
    %680 = vsyncpa [#allocation3], 1
    %681 = vsyncpa [#allocation7], 1
    %682 = vsyncpa [#allocation10], 1
    %683 = vsyncpa [#allocation13], 1
    %684 = vsyncpa [#allocation4], 1
    %685 = vsyncpa [#allocation17], 1
    %686 = vsyncpa [#allocation21], 1
    %687 = vsyncpa [#allocation5], 1

// kernel: tpu_custom_call.1
$region0: #{tpu_custom_call.1}
  #allocation0 [shape = 'u32[]', space=smem, size = 0x4, offset = 0x4, fixed_abs, tag = 'smem constant byte address 0x4 - core index']
  #allocation1 [shape = 'u32[72,128]{1,0:T(1,128)}', space=vmem, size = 0x9000, scoped, tag = 'internal scratch']
  %s0 = inlined_call_operand.hbm [shape: bf16[8,128], index: 0, kind: input, shape index: {}]
  %s1 = inlined_call_operand.hbm [shape: f32[8,128], index: 1, kind: input, shape index: {}]
  %s2 = inlined_call_operand.hbm [shape: bf16[128,128], index: 2, kind: input, shape index: {}]
  %s3 = inlined_call_operand.vmem [shape: f32[1,128], index: 3, kind: input, shape index: {}]
  %s4 = inlined_call_operand.hbm [shape: bf16[128,128], index: 4, kind: input, shape index: {}]
  %s5 = inlined_call_operand.vmem [shape: f32[1,128], index: 5, kind: input, shape index: {}]
  %s6 = inlined_call_operand.hbm [shape: bf16[128,128], index: 6, kind: input, shape index: {}]
  %s7 = inlined_call_operand.vmem [shape: f32[1,128], index: 7, kind: input, shape index: {}]
  %s8 = inlined_call_operand.hbm [shape: bf16[128,128], index: 8, kind: input, shape index: {}]
  %s9 = inlined_call_operand.vmem [shape: f32[1,128], index: 9, kind: input, shape index: {}]
  %s10 = inlined_call_operand.hbm [shape: bf16[128,128], index: 10, kind: input, shape index: {}]
  %s11 = inlined_call_operand.vmem [shape: f32[1,128], index: 11, kind: input, shape index: {}]
  %s12 = inlined_call_operand.hbm [shape: f32[8,128], index: 12, kind: output, shape index: {0}]
  %s13 = inlined_call_operand.hbm [shape: f32[8,128], index: 13, kind: output, shape index: {1}]
  %s14 = inlined_call_operand.hbm [shape: f32[1], index: 14, kind: output, shape index: {2}]
  %s15 = inlined_call_operand.hbm [shape: f32[8,128], index: 15, kind: output, shape index: {3}]
  %s16 = inlined_call_operand.hbm [shape: bf16[8,128], index: 16, kind: output, shape index: {4}]
  %17 = xla_tuple %s12, %s13, %s14, %s15, %s16
  %s18 = sld [smem:[#allocation0]]
  $region118: #{tpu_custom_call.1} parent=0
    _
  %s20 = ssub.s32 1, %s18
  %s21 = scalar_select 0, %s20, %s18
  $region1: #{tpu_custom_call.1} parent=0
    #allocation2 [shape = 'u8[2048]{0}', space=vmem, size = 0x800, scoped, tag = 'input window, operand 0, single buffered']
    #allocation3 [shape = 's32[1]{0}', space=sflag, size = 0x4, scoped, tag = 'scoped memory for tpu_custom_call.1']
    #allocation4 [shape = 's32[1]{0}', space=sflag, size = 0x4, scoped, tag = 'scoped memory for tpu_custom_call.1']
    #allocation5 [shape = 's32[1]{0}', space=sflag, size = 0x4, scoped, tag = 'scoped memory for tpu_custom_call.1']
    #allocation6 [shape = 'u8[4096]{0}', space=vmem, size = 0x1000, scoped, tag = 'input window, operand 1, single buffered']
    #allocation7 [shape = 's32[1]{0}', space=sflag, size = 0x4, scoped, tag = 'scoped memory for tpu_custom_call.1']
    #allocation8 [shape = 'u8[32768]{0}', space=vmem, size = 0x8000, scoped, tag = 'input window, operand 2, single buffered']
    #allocation9 [shape = 'u8[32768]{0}', space=vmem, size = 0x8000, scoped, tag = 'input window, operand 4, single buffered']
    #allocation10 [shape = 's32[1]{0}', space=sflag, size = 0x4, scoped, tag = 'scoped memory for tpu_custom_call.1']
    #allocation11 [shape = 'u8[32768]{0}', space=vmem, size = 0x8000, scoped, tag = 'input window, operand 6, single buffered']
    #allocation12 [shape = 'u8[32768]{0}', space=vmem, size = 0x8000, scoped, tag = 'input window, operand 8, single buffered']
    #allocation13 [shape = 's32[1]{0}', space=sflag, size = 0x4, scoped, tag = 'scoped memory for tpu_custom_call.1']
    #allocation14 [shape = 'u8[32768]{0}', space=vmem, size = 0x8000, scoped, tag = 'input window, operand 10, single buffered']
    #allocation15 [shape = 'u8[4096]{0}', space=vmem, size = 0x1000, scoped, tag = 'output window, operand 0, single buffered']
    #allocation16 [shape = 'u8[4096]{0}', space=vmem, size = 0x1000, scoped, tag = 'output window, operand 1, single buffered']
    #allocation17 [shape = 's32[1]{0}', space=sflag, size = 0x4, scoped, tag = 'scoped memory for tpu_custom_call.1']
    #allocation18 [shape = 'u8[512]{0}', space=smem, size = 0x200, scoped, tag = 'output window, operand 2, single buffered']
    #allocation19 [shape = 'u8[4096]{0}', space=vmem, size = 0x1000, scoped, tag = 'output window, operand 3, single buffered']
    #allocation20 [shape = 'u8[2048]{0}', space=vmem, size = 0x800, scoped, tag = 'output window, operand 4, single buffered']
    #allocation21 [shape = 's32[1]{0}', space=sflag, size = 0x4, scoped, tag = 'scoped memory for tpu_custom_call.1']
    %22 = vsyncpa [#allocation3], 0
    %23 = vsyncpa [#allocation7], 0
    %24 = vsyncpa [#allocation10], 0
    %25 = vsyncpa [#allocation13], 0
    %26 = vsyncpa [#allocation4], 0
    %27 = vsyncpa [#allocation17], 0
    %28 = vsyncpa [#allocation5], 0
    %29 = vsyncpa [#allocation21], 0
    // Predicated region
    $region2: #{tpu_custom_call.1} parent=1 // pred_check
      _
    $region3: #{tpu_custom_call.1} parent=1 // pred_check_branch
      %31 = sbr.rel (0) target = $region5
    $region4: #{tpu_custom_call.1} parent=1 // pred_region
      %33 = vsyncadd [#allocation3], 0
      %s35 = sshll.u32 %s0, 4
      %s36 = int_to_ptr.hbm [resolvable:$true] %s35
      %s37 = sshll.u32 [#allocation2], 4
      %s38 = int_to_ptr.vmem [resolvable:$true] %s37
      %40 = dma.hbm_to_vmem [thread:$0]  %s36, 64, %s38, [#allocation3]
    $region5: #{tpu_custom_call.1} parent=1 // pred_fallthru
      _
    // Predicated region
    $region6: #{tpu_custom_call.1} parent=1 // pred_check
      _
    $region7: #{tpu_custom_call.1} parent=1 // pred_check_branch
      %42 = sbr.rel (0) target = $region9
    $region8: #{tpu_custom_call.1} parent=1 // pred_region
      %44 = vsyncadd [#allocation7], 0
      %s46 = sshll.u32 %s1, 4
      %s47 = int_to_ptr.hbm [resolvable:$true] %s46
      %s48 = sshll.u32 [#allocation6], 4
      %s49 = int_to_ptr.vmem [resolvable:$true] %s48
      %51 = dma.hbm_to_vmem [thread:$0]  %s47, 128, %s49, [#allocation7]
    $region9: #{tpu_custom_call.1} parent=1 // pred_fallthru
      _
    // Predicated region
    $region10: #{tpu_custom_call.1} parent=1 // pred_check
      _
    $region11: #{tpu_custom_call.1} parent=1 // pred_check_branch
      %53 = sbr.rel (0) target = $region13
    $region12: #{tpu_custom_call.1} parent=1 // pred_region
      %55 = vsyncadd [#allocation7], 0
      %s56 = sshll.u32 %s2, 4
      %s57 = int_to_ptr.hbm [resolvable:$true] %s56
      %s58 = sshll.u32 [#allocation8], 4
      %s59 = int_to_ptr.vmem [resolvable:$true] %s58
      %64 = dma.hbm_to_vmem [thread:$0]  %s57, 1024, %s59, [#allocation7], 64, 64, 4
    $region13: #{tpu_custom_call.1} parent=1 // pred_fallthru
      _
    // Predicated region
    $region14: #{tpu_custom_call.1} parent=1 // pred_check
      _
    $region15: #{tpu_custom_call.1} parent=1 // pred_check_branch
      %66 = sbr.rel (0) target = $region17
    $region16: #{tpu_custom_call.1} parent=1 // pred_region
      _
    $region17: #{tpu_custom_call.1} parent=1 // pred_fallthru
      _
    // Predicated region
    $region18: #{tpu_custom_call.1} parent=1 // pred_check
      _
    $region19: #{tpu_custom_call.1} parent=1 // pred_check_branch
      %68 = sbr.rel (0) target = $region21
    $region20: #{tpu_custom_call.1} parent=1 // pred_region
      %70 = vsyncadd [#allocation10], 0
      %s71 = sshll.u32 %s4, 4
      %s72 = int_to_ptr.hbm [resolvable:$true] %s71
      %s73 = sshll.u32 [#allocation9], 4
      %s74 = int_to_ptr.vmem [resolvable:$true] %s73
      %79 = dma.hbm_to_vmem [thread:$0]  %s72, 1024, %s74, [#allocation10], 64, 64, 4
    $region21: #{tpu_custom_call.1} parent=1 // pred_fallthru
      _
    // Predicated region
    $region22: #{tpu_custom_call.1} parent=1 // pred_check
      _
    $region23: #{tpu_custom_call.1} parent=1 // pred_check_branch
      %81 = sbr.rel (0) target = $region25
    $region24: #{tpu_custom_call.1} parent=1 // pred_region
      _
    $region25: #{tpu_custom_call.1} parent=1 // pred_fallthru
      _
    // Predicated region
    $region26: #{tpu_custom_call.1} parent=1 // pred_check
      _
    $region27: #{tpu_custom_call.1} parent=1 // pred_check_branch
      %83 = sbr.rel (0) target = $region29
    $region28: #{tpu_custom_call.1} parent=1 // pred_region
      %85 = vsyncadd [#allocation10], 0
      %s86 = sshll.u32 %s6, 4
      %s87 = int_to_ptr.hbm [resolvable:$true] %s86
      %s88 = sshll.u32 [#allocation11], 4
      %s89 = int_to_ptr.vmem [resolvable:$true] %s88
      %94 = dma.hbm_to_vmem [thread:$0]  %s87, 1024, %s89, [#allocation10], 64, 64, 4
    $region29: #{tpu_custom_call.1} parent=1 // pred_fallthru
      _
    // Predicated region
    $region30: #{tpu_custom_call.1} parent=1 // pred_check
      _
    $region31: #{tpu_custom_call.1} parent=1 // pred_check_branch
      %96 = sbr.rel (0) target = $region33
    $region32: #{tpu_custom_call.1} parent=1 // pred_region
      _
    $region33: #{tpu_custom_call.1} parent=1 // pred_fallthru
      _
    // Predicated region
    $region34: #{tpu_custom_call.1} parent=1 // pred_check
      _
    $region35: #{tpu_custom_call.1} parent=1 // pred_check_branch
      %98 = sbr.rel (0) target = $region37
    $region36: #{tpu_custom_call.1} parent=1 // pred_region
      %100 = vsyncadd [#allocation13], 0
      %s101 = sshll.u32 %s8, 4
      %s102 = int_to_ptr.hbm [resolvable:$true] %s101
      %s103 = sshll.u32 [#allocation12], 4
      %s104 = int_to_ptr.vmem [resolvable:$true] %s103
      %109 = dma.hbm_to_vmem [thread:$0]  %s102, 1024, %s104, [#allocation13], 64, 64, 4
    $region37: #{tpu_custom_call.1} parent=1 // pred_fallthru
      _
    // Predicated region
    $region38: #{tpu_custom_call.1} parent=1 // pred_check
      _
    $region39: #{tpu_custom_call.1} parent=1 // pred_check_branch
      %111 = sbr.rel (0) target = $region41
    $region40: #{tpu_custom_call.1} parent=1 // pred_region
      _
    $region41: #{tpu_custom_call.1} parent=1 // pred_fallthru
      _
    // Predicated region
    $region42: #{tpu_custom_call.1} parent=1 // pred_check
      _
    $region43: #{tpu_custom_call.1} parent=1 // pred_check_branch
      %113 = sbr.rel (0) target = $region45
    $region44: #{tpu_custom_call.1} parent=1 // pred_region
      %115 = vsyncadd [#allocation13], 0
      %s116 = sshll.u32 %s10, 4
      %s117 = int_to_ptr.hbm [resolvable:$true] %s116
      %s118 = sshll.u32 [#allocation14], 4
      %s119 = int_to_ptr.vmem [resolvable:$true] %s118
      %124 = dma.hbm_to_vmem [thread:$0]  %s117, 1024, %s119, [#allocation13], 64, 64, 4
    $region45: #{tpu_custom_call.1} parent=1 // pred_fallthru
      _
    // Predicated region
    $region46: #{tpu_custom_call.1} parent=1 // pred_check
      _
    $region47: #{tpu_custom_call.1} parent=1 // pred_check_branch
      %126 = sbr.rel (0) target = $region49
    $region48: #{tpu_custom_call.1} parent=1 // pred_region
      _
    $region49: #{tpu_custom_call.1} parent=1 // pred_fallthru
      _
    // Predicated region
    $region50: #{tpu_custom_call.1} parent=1 // pred_check
      _
    $region51: #{tpu_custom_call.1} parent=1 // pred_check_branch
      %128 = sbr.rel (0) target = $region53
    $region52: #{tpu_custom_call.1} parent=1 // pred_region
      %130 = dma.done [#allocation3], 64
    $region53: #{tpu_custom_call.1} parent=1 // pred_fallthru
      _
    // Predicated region
    $region54: #{tpu_custom_call.1} parent=1 // pred_check
      _
    $region55: #{tpu_custom_call.1} parent=1 // pred_check_branch
      %132 = sbr.rel (0) target = $region57
    $region56: #{tpu_custom_call.1} parent=1 // pred_region
      %134 = dma.done [#allocation7], 128
    $region57: #{tpu_custom_call.1} parent=1 // pred_fallthru
      _
    // Predicated region
    $region58: #{tpu_custom_call.1} parent=1 // pred_check
      _
    $region59: #{tpu_custom_call.1} parent=1 // pred_check_branch
      %136 = sbr.rel (0) target = $region61
    $region60: #{tpu_custom_call.1} parent=1 // pred_region
      %138 = dma.done [#allocation7], 1024
    $region61: #{tpu_custom_call.1} parent=1 // pred_fallthru
      _
    // Predicated region
    $region62: #{tpu_custom_call.1} parent=1 // pred_check
      _
    $region63: #{tpu_custom_call.1} parent=1 // pred_check_branch
      %140 = sbr.rel (0) target = $region65
    $region64: #{tpu_custom_call.1} parent=1 // pred_region
      %142 = dma.done [#allocation10], 1024
    $region65: #{tpu_custom_call.1} parent=1 // pred_fallthru
      _
    // Predicated region
    $region66: #{tpu_custom_call.1} parent=1 // pred_check
      _
    $region67: #{tpu_custom_call.1} parent=1 // pred_check_branch
      %144 = sbr.rel (0) target = $region69
    $region68: #{tpu_custom_call.1} parent=1 // pred_region
      %146 = dma.done [#allocation10], 1024
    $region69: #{tpu_custom_call.1} parent=1 // pred_fallthru
      _
    // Predicated region
    $region70: #{tpu_custom_call.1} parent=1 // pred_check
      _
    $region71: #{tpu_custom_call.1} parent=1 // pred_check_branch
      %148 = sbr.rel (0) target = $region73
    $region72: #{tpu_custom_call.1} parent=1 // pred_region
      %150 = dma.done [#allocation13], 1024
    $region73: #{tpu_custom_call.1} parent=1 // pred_fallthru
      _
    // Predicated region
    $region74: #{tpu_custom_call.1} parent=1 // pred_check
      _
    $region75: #{tpu_custom_call.1} parent=1 // pred_check_branch
      %152 = sbr.rel (0) target = $region77
    $region76: #{tpu_custom_call.1} parent=1 // pred_region
      %154 = dma.done [#allocation13], 1024
    $region77: #{tpu_custom_call.1} parent=1 // pred_fallthru
      _
    %v155 = vld [vmem:[#allocation2] sm:$0xf]
    %v156 = vld [vmem:[#allocation8] sm:$0xf]
    %v157 = vld [vmem:[#allocation8 + $0x4] sm:$0xf]
    %v158 = vld [vmem:[#allocation8 + $0x8] sm:$0xf]
    %v159 = vld [vmem:[#allocation8 + $0xc] sm:$0xf]
    %v160 = vld [vmem:[#allocation8 + $0x10] sm:$0xf]
    %v161 = vld [vmem:[#allocation8 + $0x14] sm:$0xf]
    %v162 = vld [vmem:[#allocation8 + $0x18] sm:$0xf]
    %v163 = vld [vmem:[#allocation8 + $0x1c] sm:$0xf]
    %v164 = vld [vmem:[#allocation8 + $0x20] sm:$0xf]
    %v165 = vld [vmem:[#allocation8 + $0x24] sm:$0xf]
    %v166 = vld [vmem:[#allocation8 + $0x28] sm:$0xf]
    %v167 = vld [vmem:[#allocation8 + $0x2c] sm:$0xf]
    %v168 = vld [vmem:[#allocation8 + $0x30] sm:$0xf]
    %v169 = vld [vmem:[#allocation8 + $0x34] sm:$0xf]
    %v170 = vld [vmem:[#allocation8 + $0x38] sm:$0xf]
    %v171 = vld [vmem:[#allocation8 + $0x3c] sm:$0xf]
    %v172 = vld [vmem:[%s3] sm:$0x1]
    %v174 = vperm.slane %v172, 0
    %v192 = vunpack.c.l.b16 %v156
    %v193 = vunpack.c.l.b16 %v157
    %v194 = vunpack.c.l.b16 %v158
    %v195 = vunpack.c.l.b16 %v159
    %v196 = vunpack.c.l.b16 %v160
    %v197 = vunpack.c.l.b16 %v161
    %v198 = vunpack.c.l.b16 %v162
    %v199 = vunpack.c.l.b16 %v163
    %v200 = vunpack.c.l.b16 %v164
    %v201 = vunpack.c.l.b16 %v165
    %v202 = vunpack.c.l.b16 %v166
    %v203 = vunpack.c.l.b16 %v167
    %v204 = vunpack.c.l.b16 %v168
    %v205 = vunpack.c.l.b16 %v169
    %v206 = vunpack.c.l.b16 %v170
    %v207 = vunpack.c.l.b16 %v171
    %v208 = vpack.c.b16 %v193, %v192
    %v209 = vpack.c.b16 %v195, %v194
    %v210 = vpack.c.b16 %v197, %v196
    %v211 = vpack.c.b16 %v199, %v198
    %v212 = vpack.c.b16 %v201, %v200
    %v213 = vpack.c.b16 %v203, %v202
    %v214 = vpack.c.b16 %v205, %v204
    %v215 = vpack.c.b16 %v207, %v206
    %224 = vmatpush.bf16.msra.mxu0 %v215
    %225 = vmatpush.bf16.msra.mxu0 %v214
    %226 = vmatpush.bf16.msra.mxu0 %v213
    %227 = vmatpush.bf16.msra.mxu0 %v212
    %228 = vmatpush.bf16.msra.mxu0 %v211
    %229 = vmatpush.bf16.msra.mxu0 %v210
    %230 = vmatpush.bf16.msra.mxu0 %v209
    %231 = vmatpush.bf16.msra.mxu0 %v208
    %232 = vmatmul.bf16.gmra.mxu0 %v155
    %v233 = vpop.f32.mrf.mxu0
    %v234 = vadd.f32 %v174, %v233
    %v235 = vpop.f32.mrf.mxu0
    %236 = vdwg.mxu0
    %v237 = vmax.f32 %v234, 0.0
    %v238 = vpack.c.bf16 %v237, %v237
    %v239 = vld [vmem:[#allocation9] sm:$0xf]
    %v240 = vld [vmem:[#allocation9 + $0x4] sm:$0xf]
    %v241 = vld [vmem:[#allocation9 + $0x8] sm:$0xf]
    %v242 = vld [vmem:[#allocation9 + $0xc] sm:$0xf]
    %v243 = vld [vmem:[#allocation9 + $0x10] sm:$0xf]
    %v244 = vld [vmem:[#allocation9 + $0x14] sm:$0xf]
    %v245 = vld [vmem:[#allocation9 + $0x18] sm:$0xf]
    %v246 = vld [vmem:[#allocation9 + $0x1c] sm:$0xf]
    %v247 = vld [vmem:[#allocation9 + $0x20] sm:$0xf]
    %v248 = vld [vmem:[#allocation9 + $0x24] sm:$0xf]
    %v249 = vld [vmem:[#allocation9 + $0x28] sm:$0xf]
    %v250 = vld [vmem:[#allocation9 + $0x2c] sm:$0xf]
    %v251 = vld [vmem:[#allocation9 + $0x30] sm:$0xf]
    %v252 = vld [vmem:[#allocation9 + $0x34] sm:$0xf]
    %v253 = vld [vmem:[#allocation9 + $0x38] sm:$0xf]
    %v254 = vld [vmem:[#allocation9 + $0x3c] sm:$0xf]
    %v255 = vld [vmem:[%s5] sm:$0x1]
    %v257 = vperm.slane %v255, 0
    %v275 = vunpack.c.l.b16 %v239
    %v276 = vunpack.c.l.b16 %v240
    %v277 = vunpack.c.l.b16 %v241
    %v278 = vunpack.c.l.b16 %v242
    %v279 = vunpack.c.l.b16 %v243
    %v280 = vunpack.c.l.b16 %v244
    %v281 = vunpack.c.l.b16 %v245
    %v282 = vunpack.c.l.b16 %v246
    %v283 = vunpack.c.l.b16 %v247
    %v284 = vunpack.c.l.b16 %v248
    %v285 = vunpack.c.l.b16 %v249
    %v286 = vunpack.c.l.b16 %v250
    %v287 = vunpack.c.l.b16 %v251
    %v288 = vunpack.c.l.b16 %v252
    %v289 = vunpack.c.l.b16 %v253
    %v290 = vunpack.c.l.b16 %v254
    %v291 = vpack.c.b16 %v276, %v275
    %v292 = vpack.c.b16 %v278, %v277
    %v293 = vpack.c.b16 %v280, %v279
    %v294 = vpack.c.b16 %v282, %v281
    %v295 = vpack.c.b16 %v284, %v283
    %v296 = vpack.c.b16 %v286, %v285
    %v297 = vpack.c.b16 %v288, %v287
    %v298 = vpack.c.b16 %v290, %v289
    %307 = vmatpush.bf16.msra.mxu0 %v298
    %308 = vmatpush.bf16.msra.mxu0 %v297
    %309 = vmatpush.bf16.msra.mxu0 %v296
    %310 = vmatpush.bf16.msra.mxu0 %v295
    %311 = vmatpush.bf16.msra.mxu0 %v294
    %312 = vmatpush.bf16.msra.mxu0 %v293
    %313 = vmatpush.bf16.msra.mxu0 %v292
    %314 = vmatpush.bf16.msra.mxu0 %v291
    %315 = vmatmul.bf16.gmra.mxu0 %v238
    %v316 = vpop.f32.mrf.mxu0
    %v317 = vadd.f32 %v257, %v316
    %v318 = vpop.f32.mrf.mxu0
    %319 = vdwg.mxu0
    %v320 = vmax.f32 %v317, 0.0
    %v321 = vpack.c.bf16 %v320, %v320
    %v322 = vld [vmem:[#allocation11] sm:$0xf]
    %v323 = vld [vmem:[#allocation11 + $0x4] sm:$0xf]
    %v324 = vld [vmem:[#allocation11 + $0x8] sm:$0xf]
    %v325 = vld [vmem:[#allocation11 + $0xc] sm:$0xf]
    %v326 = vld [vmem:[#allocation11 + $0x10] sm:$0xf]
    %v327 = vld [vmem:[#allocation11 + $0x14] sm:$0xf]
    %v328 = vld [vmem:[#allocation11 + $0x18] sm:$0xf]
    %v329 = vld [vmem:[#allocation11 + $0x1c] sm:$0xf]
    %v330 = vld [vmem:[#allocation11 + $0x20] sm:$0xf]
    %v331 = vld [vmem:[#allocation11 + $0x24] sm:$0xf]
    %v332 = vld [vmem:[#allocation11 + $0x28] sm:$0xf]
    %v333 = vld [vmem:[#allocation11 + $0x2c] sm:$0xf]
    %v334 = vld [vmem:[#allocation11 + $0x30] sm:$0xf]
    %v335 = vld [vmem:[#allocation11 + $0x34] sm:$0xf]
    %v336 = vld [vmem:[#allocation11 + $0x38] sm:$0xf]
    %v337 = vld [vmem:[#allocation11 + $0x3c] sm:$0xf]
    %v338 = vld [vmem:[%s7] sm:$0x1]
    %v340 = vperm.slane %v338, 0
    %v358 = vunpack.c.l.b16 %v322
    %v359 = vunpack.c.l.b16 %v323
    %v360 = vunpack.c.l.b16 %v324
    %v361 = vunpack.c.l.b16 %v325
    %v362 = vunpack.c.l.b16 %v326
    %v363 = vunpack.c.l.b16 %v327
    %v364 = vunpack.c.l.b16 %v328
    %v365 = vunpack.c.l.b16 %v329
    %v366 = vunpack.c.l.b16 %v330
    %v367 = vunpack.c.l.b16 %v331
    %v368 = vunpack.c.l.b16 %v332
    %v369 = vunpack.c.l.b16 %v333
    %v370 = vunpack.c.l.b16 %v334
    %v371 = vunpack.c.l.b16 %v335
    %v372 = vunpack.c.l.b16 %v336
    %v373 = vunpack.c.l.b16 %v337
    %v374 = vpack.c.b16 %v359, %v358
    %v375 = vpack.c.b16 %v361, %v360
    %v376 = vpack.c.b16 %v363, %v362
    %v377 = vpack.c.b16 %v365, %v364
    %v378 = vpack.c.b16 %v367, %v366
    %v379 = vpack.c.b16 %v369, %v368
    %v380 = vpack.c.b16 %v371, %v370
    %v381 = vpack.c.b16 %v373, %v372
    %390 = vmatpush.bf16.msra.mxu0 %v381
    %391 = vmatpush.bf16.msra.mxu0 %v380
    %392 = vmatpush.bf16.msra.mxu0 %v379
    %393 = vmatpush.bf16.msra.mxu0 %v378
    %394 = vmatpush.bf16.msra.mxu0 %v377
    %395 = vmatpush.bf16.msra.mxu0 %v376
    %396 = vmatpush.bf16.msra.mxu0 %v375
    %397 = vmatpush.bf16.msra.mxu0 %v374
    %398 = vmatmul.bf16.gmra.mxu0 %v321
    %v399 = vpop.f32.mrf.mxu0
    %v400 = vadd.f32 %v340, %v399
    %v401 = vpop.f32.mrf.mxu0
    %402 = vdwg.mxu0
    %v403 = vld [vmem:[#allocation12] sm:$0xf]
    %v404 = vld [vmem:[#allocation12 + $0x4] sm:$0xf]
    %v405 = vld [vmem:[#allocation12 + $0x8] sm:$0xf]
    %v406 = vld [vmem:[#allocation12 + $0xc] sm:$0xf]
    %v407 = vld [vmem:[#allocation12 + $0x10] sm:$0xf]
    %v408 = vld [vmem:[#allocation12 + $0x14] sm:$0xf]
    %v409 = vld [vmem:[#allocation12 + $0x18] sm:$0xf]
    %v410 = vld [vmem:[#allocation12 + $0x1c] sm:$0xf]
    %v411 = vld [vmem:[#allocation12 + $0x20] sm:$0xf]
    %v412 = vld [vmem:[#allocation12 + $0x24] sm:$0xf]
    %v413 = vld [vmem:[#allocation12 + $0x28] sm:$0xf]
    %v414 = vld [vmem:[#allocation12 + $0x2c] sm:$0xf]
    %v415 = vld [vmem:[#allocation12 + $0x30] sm:$0xf]
    %v416 = vld [vmem:[#allocation12 + $0x34] sm:$0xf]
    %v417 = vld [vmem:[#allocation12 + $0x38] sm:$0xf]
    %v418 = vld [vmem:[#allocation12 + $0x3c] sm:$0xf]
    %v419 = vld [vmem:[%s9] sm:$0x1]
    %v421 = vperm.slane %v419, 0
    %v439 = vunpack.c.l.b16 %v403
    %v440 = vunpack.c.l.b16 %v404
    %v441 = vunpack.c.l.b16 %v405
    %v442 = vunpack.c.l.b16 %v406
    %v443 = vunpack.c.l.b16 %v407
    %v444 = vunpack.c.l.b16 %v408
    %v445 = vunpack.c.l.b16 %v409
    %v446 = vunpack.c.l.b16 %v410
    %v447 = vunpack.c.l.b16 %v411
    %v448 = vunpack.c.l.b16 %v412
    %v449 = vunpack.c.l.b16 %v413
    %v450 = vunpack.c.l.b16 %v414
    %v451 = vunpack.c.l.b16 %v415
    %v452 = vunpack.c.l.b16 %v416
    %v453 = vunpack.c.l.b16 %v417
    %v454 = vunpack.c.l.b16 %v418
    %v455 = vpack.c.b16 %v440, %v439
    %v456 = vpack.c.b16 %v442, %v441
    %v457 = vpack.c.b16 %v444, %v443
    %v458 = vpack.c.b16 %v446, %v445
    %v459 = vpack.c.b16 %v448, %v447
    %v460 = vpack.c.b16 %v450, %v449
    %v461 = vpack.c.b16 %v452, %v451
    %v462 = vpack.c.b16 %v454, %v453
    %471 = vmatpush.bf16.msra.mxu0 %v462
    %472 = vmatpush.bf16.msra.mxu0 %v461
    %473 = vmatpush.bf16.msra.mxu0 %v460
    %474 = vmatpush.bf16.msra.mxu0 %v459
    %475 = vmatpush.bf16.msra.mxu0 %v458
    %476 = vmatpush.bf16.msra.mxu0 %v457
    %477 = vmatpush.bf16.msra.mxu0 %v456
    %478 = vmatpush.bf16.msra.mxu0 %v455
    %479 = vmatmul.bf16.gmra.mxu0 %v321
    %v480 = vpop.f32.mrf.mxu0
    %v481 = vadd.f32 %v421, %v480
    %v482 = vpop.f32.mrf.mxu0
    %483 = vdwg.mxu0
    %484 = vst [vmem:[#allocation15] sm:$0xff] %v400
    %485 = vst [vmem:[#allocation16] sm:$0xff] %v481
    %v486 = vmul.f32 %v481, 1.442695
    %v487 = vpow.pop %v486
    %v488 = vmul.f32 %v400, %v400
    %v489 = vadd.f32 %v487, %v488
    %v490 = vsub.f32 %v489, 1.0
    %v491 = vsub.f32 %v490, %v481
    %492 = vadd.xlane.f32.xlu0 %v491
    %v493 = vpop.xlane.xlu0 %492
    %v494 = vmul.f32 %v493, 0.5
    %v495 = vmul.f32 %v494, 0.125
    %v496 = vlaneseq
    %v497 = vshrl.u32 %v496, 7
    %vm498 = vcmp.lt.s32.totalorder %v497, 2
    %v499 = vsel %vm498, %v495, 0.0
    %vm500 = vcmask 7168
    %v501 = vsel %vm500, %v499, 0.0
    %502 = vadd.xlane.f32.xlu0 %v501
    %v503 = vpop.xlane.xlu0 %502
    %v504 = vrot.slane %v503, 4
    %v505 = vadd.f32 %v503, %v504
    %v506 = vrot.slane %v505, 2
    %v507 = vadd.f32 %v505, %v506
    %v508 = vrot.slane %v507, 1
    %v509 = vadd.f32 %v507, %v508
    %s510 = vtos %v509
    %s511 = smul.f32 %s510, 0.5
    %s512 = scalar_lea.smem [#allocation18], 0
    %513 = sst [smem:[%s512]] %s511
    %v514 = vld [vmem:[#allocation6] sm:$0xff]
    %v515 = vmul.f32 %v481, 0.5
    %v516 = vmul.f32 %v515, 1.442695
    %v517 = vpow.pop %v516
    %v518 = vmul.f32 %v514, %v517
    %v519 = vadd.f32 %v400, %v518
    %520 = vst [vmem:[#allocation19] sm:$0xff] %v519
    %v521 = vpack.c.bf16 %v519, %v519
    %v522 = vld [vmem:[#allocation14] sm:$0xf]
    %v523 = vld [vmem:[#allocation14 + $0x4] sm:$0xf]
    %v524 = vld [vmem:[#allocation14 + $0x8] sm:$0xf]
    %v525 = vld [vmem:[#allocation14 + $0xc] sm:$0xf]
    %v526 = vld [vmem:[#allocation14 + $0x10] sm:$0xf]
    %v527 = vld [vmem:[#allocation14 + $0x14] sm:$0xf]
    %v528 = vld [vmem:[#allocation14 + $0x18] sm:$0xf]
    %v529 = vld [vmem:[#allocation14 + $0x1c] sm:$0xf]
    %v530 = vld [vmem:[#allocation14 + $0x20] sm:$0xf]
    %v531 = vld [vmem:[#allocation14 + $0x24] sm:$0xf]
    %v532 = vld [vmem:[#allocation14 + $0x28] sm:$0xf]
    %v533 = vld [vmem:[#allocation14 + $0x2c] sm:$0xf]
    %v534 = vld [vmem:[#allocation14 + $0x30] sm:$0xf]
    %v535 = vld [vmem:[#allocation14 + $0x34] sm:$0xf]
    %v536 = vld [vmem:[#allocation14 + $0x38] sm:$0xf]
    %v537 = vld [vmem:[#allocation14 + $0x3c] sm:$0xf]
    %v538 = vld [vmem:[%s11] sm:$0x1]
    %v540 = vperm.slane %v538, 0
    %v558 = vunpack.c.l.b16 %v522
    %v559 = vunpack.c.l.b16 %v523
    %v560 = vunpack.c.l.b16 %v524
    %v561 = vunpack.c.l.b16 %v525
    %v562 = vunpack.c.l.b16 %v526
    %v563 = vunpack.c.l.b16 %v527
    %v564 = vunpack.c.l.b16 %v528
    %v565 = vunpack.c.l.b16 %v529
    %v566 = vunpack.c.l.b16 %v530
    %v567 = vunpack.c.l.b16 %v531
    %v568 = vunpack.c.l.b16 %v532
    %v569 = vunpack.c.l.b16 %v533
    %v570 = vunpack.c.l.b16 %v534
    %v571 = vunpack.c.l.b16 %v535
    %v572 = vunpack.c.l.b16 %v536
    %v573 = vunpack.c.l.b16 %v537
    %v574 = vpack.c.b16 %v559, %v558
    %v575 = vpack.c.b16 %v561, %v560
    %v576 = vpack.c.b16 %v563, %v562
    %v577 = vpack.c.b16 %v565, %v564
    %v578 = vpack.c.b16 %v567, %v566
    %v579 = vpack.c.b16 %v569, %v568
    %v580 = vpack.c.b16 %v571, %v570
    %v581 = vpack.c.b16 %v573, %v572
    %590 = vmatpush.bf16.msra.mxu0 %v581
    %591 = vmatpush.bf16.msra.mxu0 %v580
    %592 = vmatpush.bf16.msra.mxu0 %v579
    %593 = vmatpush.bf16.msra.mxu0 %v578
    %594 = vmatpush.bf16.msra.mxu0 %v577
    %595 = vmatpush.bf16.msra.mxu0 %v576
    %596 = vmatpush.bf16.msra.mxu0 %v575
    %597 = vmatpush.bf16.msra.mxu0 %v574
    %598 = vmatmul.bf16.gmra.mxu0 %v521
    %v599 = vpop.f32.mrf.mxu0
    %v600 = vadd.f32 %v540, %v599
    %v601 = vpop.f32.mrf.mxu0
    %602 = vdwg.mxu0
    %v603 = vmax.f32 %v600, 0.0
    %v604 = vpack.c.bf16 %v603, %v603
    %605 = vst [vmem:[#allocation20] sm:$0xf] %v604
    // Predicated region
    $region78: #{tpu_custom_call.1} parent=1 // pred_check
      _
    $region79: #{tpu_custom_call.1} parent=1 // pred_check_branch
      %607 = sbr.rel (0) target = $region81
    $region80: #{tpu_custom_call.1} parent=1 // pred_region
      %609 = vsyncadd [#allocation4], 0
      %s611 = sshll.u32 [#allocation15], 4
      %s612 = int_to_ptr.vmem [resolvable:$true] %s611
      %s613 = sshll.u32 %s12, 4
      %s614 = int_to_ptr.hbm [resolvable:$true] %s613
      %616 = dma.vmem_to_hbm [thread:$0]  %s612, 128, %s614, [#allocation4]
    $region81: #{tpu_custom_call.1} parent=1 // pred_fallthru
      _
    // Predicated region
    $region82: #{tpu_custom_call.1} parent=1 // pred_check
      _
    $region83: #{tpu_custom_call.1} parent=1 // pred_check_branch
      %618 = sbr.rel (0) target = $region85
    $region84: #{tpu_custom_call.1} parent=1 // pred_region
      %620 = vsyncadd [#allocation17], 0
      %s622 = sshll.u32 [#allocation16], 4
      %s623 = int_to_ptr.vmem [resolvable:$true] %s622
      %s624 = sshll.u32 %s13, 4
      %s625 = int_to_ptr.hbm [resolvable:$true] %s624
      %627 = dma.vmem_to_hbm [thread:$0]  %s623, 128, %s625, [#allocation17]
    $region85: #{tpu_custom_call.1} parent=1 // pred_fallthru
      _
    // Predicated region
    $region86: #{tpu_custom_call.1} parent=1 // pred_check
      _
    $region87: #{tpu_custom_call.1} parent=1 // pred_check_branch
      %629 = sbr.rel (0) target = $region89
    $region88: #{tpu_custom_call.1} parent=1 // pred_region
      %631 = vsyncadd [#allocation5], 0
      %s633 = sshll.u32 %s14, 4
      %s634 = int_to_ptr.hbm [resolvable:$true] %s633
      %636 = dma.smem_to_hbm [#allocation18], 16, %s634, [#allocation5]
    $region89: #{tpu_custom_call.1} parent=1 // pred_fallthru
      _
    // Predicated region
    $region90: #{tpu_custom_call.1} parent=1 // pred_check
      _
    $region91: #{tpu_custom_call.1} parent=1 // pred_check_branch
      %638 = sbr.rel (0) target = $region93
    $region92: #{tpu_custom_call.1} parent=1 // pred_region
      %640 = vsyncadd [#allocation17], 0
      %s642 = sshll.u32 [#allocation19], 4
      %s643 = int_to_ptr.vmem [resolvable:$true] %s642
      %s644 = sshll.u32 %s15, 4
      %s645 = int_to_ptr.hbm [resolvable:$true] %s644
      %647 = dma.vmem_to_hbm [thread:$0]  %s643, 128, %s645, [#allocation17]
    $region93: #{tpu_custom_call.1} parent=1 // pred_fallthru
      _
    // Predicated region
    $region94: #{tpu_custom_call.1} parent=1 // pred_check
      _
    $region95: #{tpu_custom_call.1} parent=1 // pred_check_branch
      %649 = sbr.rel (0) target = $region97
    $region96: #{tpu_custom_call.1} parent=1 // pred_region
      %651 = vsyncadd [#allocation21], 0
      %s653 = sshll.u32 [#allocation20], 4
      %s654 = int_to_ptr.vmem [resolvable:$true] %s653
      %s655 = sshll.u32 %s16, 4
      %s656 = int_to_ptr.hbm [resolvable:$true] %s655
      %658 = dma.vmem_to_hbm [thread:$0]  %s654, 64, %s656, [#allocation21]
    $region97: #{tpu_custom_call.1} parent=1 // pred_fallthru
      _
    // Predicated region
    $region98: #{tpu_custom_call.1} parent=1 // pred_check
      _
    $region99: #{tpu_custom_call.1} parent=1 // pred_check_branch
      %660 = sbr.rel (0) target = $region101
    $region100: #{tpu_custom_call.1} parent=1 // pred_region
      %662 = dma.done [#allocation4], 128
    $region101: #{tpu_custom_call.1} parent=1 // pred_fallthru
      _
    // Predicated region
    $region102: #{tpu_custom_call.1} parent=1 // pred_check
      _
    $region103: #{tpu_custom_call.1} parent=1 // pred_check_branch
      %664 = sbr.rel (0) target = $region105
    $region104: #{tpu_custom_call.1} parent=1 // pred_region
      %666 = dma.done [#allocation17], 128
    $region105: #{tpu_custom_call.1} parent=1 // pred_fallthru
      _
    // Predicated region
    $region106: #{tpu_custom_call.1} parent=1 // pred_check
      _
    $region107: #{tpu_custom_call.1} parent=1 // pred_check_branch
      %668 = sbr.rel (0) target = $region109
    $region108: #{tpu_custom_call.1} parent=1 // pred_region
      %670 = dma.done [#allocation5], 16
    $region109: #{tpu_custom_call.1} parent=1 // pred_fallthru
      _
    // Predicated region
    $region110: #{tpu_custom_call.1} parent=1 // pred_check
      _
    $region111: #{tpu_custom_call.1} parent=1 // pred_check_branch
      %672 = sbr.rel (0) target = $region113
    $region112: #{tpu_custom_call.1} parent=1 // pred_region
      %674 = dma.done [#allocation17], 128
    $region113: #{tpu_custom_call.1} parent=1 // pred_fallthru
      _
    // Predicated region
    $region114: #{tpu_custom_call.1} parent=1 // pred_check
      _
    $region115: #{tpu_custom_call.1} parent=1 // pred_check_branch
      %676 = sbr.rel (0) target = $region117
    $region116: #{tpu_custom_call.1} parent=1 // pred_region
      %678 = dma.done [#allocation21], 64
    $region117: #{tpu_custom_call.1} parent=1 // pred_fallthru
      _
    %679 = sfence
    %680 = vsyncpa [#allocation3], 1
    %681 = vsyncpa [#allocation7], 1
    %682 = vsyncpa [#allocation10], 1
    %683 = vsyncpa [#allocation13], 1
    %684 = vsyncpa [#allocation4], 1
    %685 = vsyncpa [#allocation17], 1
    %686 = vsyncpa [#allocation21], 1
    %687 = vsyncpa [#allocation5], 1

</llo_original>
